<compile_context>
chip_gen: v6e
topology: v6e:2x2x1
jax: 0.10.0
libtpu: 0.0.40
codegen_flags: <defaults>
</compile_context>

<pallas_src>
import functools

import jax
import jax.numpy as jnp
from jax.experimental import pallas as pl
from jax.experimental.pallas import tpu as pltpu


def conv1x1_kernel(x_ref, w_ref, o_ref):
    # x_ref: (1, Cin, HW) f32   w_ref: (tCout, Cin) bf16   o_ref: (1, tCout, HW) out_dtype
    x_bf16 = x_ref[0].astype(jnp.bfloat16)  # cast in VMEM; no extra HBM traffic
    o_ref[0] = jnp.dot(
        w_ref[...], x_bf16, preferred_element_type=jnp.float32
    ).astype(o_ref.dtype)


def prepare_conv1x1_weight(w_oi11: jax.Array) -> jax.Array:
    """One-time weight prep (call OUTSIDE any jitted forward): [Cout,Cin,1,1] f32 -> [Cout,Cin] bf16."""
    cout, cin = int(w_oi11.shape[0]), int(w_oi11.shape[1])
    return jnp.asarray(w_oi11).reshape(cout, cin).astype(jnp.bfloat16)


@functools.partial(jax.jit, static_argnames=("cout_tile", "out_dtype"))
def conv2d_1x1(
    x_nchw: jax.Array,
    w2d_bf16: jax.Array,
    *,
    cout_tile: int = 512,
    out_dtype=None,
) -> jax.Array:
    """1x1 conv, stride 1, no bias.

    x_nchw:   [N, Cin, H, W]  (f32)
    w2d_bf16: [Cout, Cin]     (bf16, produced once by prepare_conv1x1_weight)
    """
    n, cin, h, w = x_nchw.shape
    cout = w2d_bf16.shape[0]
    hw = h * w
    odt = jnp.dtype(out_dtype) if out_dtype is not None else x_nchw.dtype

    # Layout plumbing: pure reshape (free view), no transposes.
    x3d = x_nchw.reshape(n, cin, hw)  # [N, Cin, HW]

    n_cout_tiles = pl.cdiv(cout, cout_tile)

    # Advisory cost hint so XLA can overlap this short call with neighbors.
    cost = pl.CostEstimate(
        flops=2 * n * cout * cin * hw,
        transcendentals=0,
        bytes_accessed=(
            n * cin * hw * x_nchw.dtype.itemsize          # X read
            + cout * cin * w2d_bf16.dtype.itemsize        # W read
            + n * cout * hw * odt.itemsize                # out write
        ),
    )

    out3d = pl.pallas_call(
        conv1x1_kernel,
        out_shape=jax.ShapeDtypeStruct((n, cout, hw), odt),
        # Cout-tiles on the OUTER axis: weight block index is constant over the
        # inner batch axis, so weight tiles stay resident for N > 1.
        grid=(n_cout_tiles, n),
        in_specs=[
            # Activations: full (Cin, HW) block, selected by the batch index.
            pl.BlockSpec((1, cin, hw), lambda j, b: (b, 0, 0)),
            # Weight: one Cout tile per outer grid step.
            pl.BlockSpec((cout_tile, cin), lambda j, b: (j, 0)),
        ],
        out_specs=pl.BlockSpec((1, cout_tile, hw), lambda j, b: (b, j, 0)),
        compiler_params=pltpu.CompilerParams(
            dimension_semantics=("parallel", "parallel"),
        ),
        cost_estimate=cost,
    )(x3d, w2d_bf16)

    # Already NCHW-ordered: restore spatial dims (free view).
    return out3d.reshape(n, cout, h, w)


if __name__ == "__main__":
    key = jax.random.PRNGKey(0)
    kx, kw = jax.random.split(key)

    # Shapes implied by the module's forward: x306 ~ [1, 512, 14, 14]
    N, CIN, H, W = 1, 512, 14, 14
    COUT = 1024

    x = jax.random.normal(kx, (N, CIN, H, W), dtype=jnp.float32)
    # Matches Conv2d(512, 1024, kernel_size=1, stride=1, bias=False) weight shape.
    weight = jax.random.normal(kw, (COUT, CIN, 1, 1), dtype=jnp.float32) * 0.02

    # One-time weight prep, executed eagerly OUTSIDE the jitted forward.
    w2d = prepare_conv1x1_weight(weight)
    jax.block_until_ready(w2d)

    out = conv2d_1x1(x, w2d)
    jax.block_until_ready(out)

    # Sanity check against a plain-JAX f32 reference. The kernel multiplies in
    # bf16 (f32 accumulate), so use a loosened tolerance.
    ref = jnp.einsum("nchw,oc->nohw", x, weight.reshape(COUT, CIN))
    assert out.shape == (N, COUT, H, W), out.shape
    assert out.dtype == x.dtype, out.dtype
    assert jnp.allclose(out, ref, atol=5e-2, rtol=5e-2), float(jnp.max(jnp.abs(out - ref)))

    print("KERNEL_OK")
</pallas_src>

<mosaic_0001>
module attributes {stable_mosaic.version = 11 : i64} {
  func.func @conv1x1_kernel(%arg0: i32, %arg1: i32, %arg2: memref<1x512x196xf32, #tpu.memory_space<vmem>>, %arg3: memref<512x512xbf16, #tpu.memory_space<vmem>>, %arg4: memref<1x512x196xf32, #tpu.memory_space<vmem>>) attributes {dimension_semantics = [#tpu.dimension_semantics<parallel>, #tpu.dimension_semantics<parallel>], iteration_bounds = array<i64: 2, 1>, scalar_prefetch = 0 : i64, scratch_operands = 0 : i64, tpu.core_type = #tpu.core_type<tc>, window_params = [{transform_indices = @transform_0, window_bounds = array<i64: 1, 512, 196>}, {transform_indices = @transform_1, window_bounds = array<i64: 512, 512>}, {transform_indices = @transform_2, window_bounds = array<i64: 1, 512, 196>}]} {
    %c0 = arith.constant 0 : index
    %c0_0 = arith.constant 0 : index
    %c0_1 = arith.constant 0 : index
    %0 = vector.load %arg2[%c0, %c0_0, %c0_1] : memref<1x512x196xf32, #tpu.memory_space<vmem>>, vector<1x512x196xf32>
    %1 = vector.shape_cast %0 : vector<1x512x196xf32> to vector<512x196xf32>
    %2 = arith.truncf %1 : vector<512x196xf32> to vector<512x196xbf16>
    %c0_2 = arith.constant 0 : index
    %c0_3 = arith.constant 0 : index
    %3 = vector.load %arg3[%c0_2, %c0_3] : memref<512x512xbf16, #tpu.memory_space<vmem>>, vector<512x512xbf16>
    %cst = arith.constant dense<0.000000e+00> : vector<512x196xf32>
    %4 = tpu.matmul %3, %2, %cst {dimension_numbers = #tpu.dot_dimension_numbers<[1], [0], [0], [1], [0, 0, 1, 1], [], []>} : vector<512x512xbf16>, vector<512x196xbf16>, vector<512x196xf32> -> vector<512x196xf32>
    %c0_4 = arith.constant 0 : index
    %c0_5 = arith.constant 0 : index
    %c0_6 = arith.constant 0 : index
    %5 = vector.load %arg4[%c0_4, %c0_5, %c0_6] : memref<1x512x196xf32, #tpu.memory_space<vmem>>, vector<1x512x196xf32>
    %6 = vector.shape_cast %5 : vector<1x512x196xf32> to vector<512x196xf32>
    %7 = vector.shape_cast %4 : vector<512x196xf32> to vector<1x512x196xf32>
    tpu.vector_store %arg4[%c0_4, %c0_5, %c0_6], %7 {strides = array<i32>} : memref<1x512x196xf32, #tpu.memory_space<vmem>>, vector<1x512x196xf32>,
    return
  }
  func.func @transform_0(%arg0: i32, %arg1: i32) -> (i32, i32, i32) {
    %c0_i32 = arith.constant 0 : i32
    %c0_i32_0 = arith.constant 0 : i32
    %c0_i32_1 = arith.constant 0 : i32
    return %arg1, %c0_i32, %c0_i32_0 : i32, i32, i32
  }
  func.func @transform_1(%arg0: i32, %arg1: i32) -> (i32, i32) {
    %c0_i32 = arith.constant 0 : i32
    %c0_i32_0 = arith.constant 0 : i32
    return %arg0, %c0_i32 : i32, i32
  }
  func.func @transform_2(%arg0: i32, %arg1: i32) -> (i32, i32, i32) {
    %c0_i32 = arith.constant 0 : i32
    %c0_i32_0 = arith.constant 0 : i32
    return %arg1, %arg0, %c0_i32 : i32, i32, i32
  }
}

</mosaic_0001>

<llo_original>
// kernel: conv2d_1x1.1
$region0: #{conv2d_1x1.1}
  #allocation0 [shape = 'u32[]', space=smem, size = 0x4, offset = 0x4, fixed_abs, tag = 'smem constant byte address 0x4 - core index']
  #allocation1 [shape = 'u32[144,128]{1,0:T(1,128)}', space=vmem, size = 0x12000, scoped, tag = 'internal scratch']
  %s0 = inlined_call_operand.vmem [shape: f32[1,512,196], index: 0, kind: input, shape index: {}]
  %s1 = inlined_call_operand.hbm [shape: bf16[1024,512], index: 1, kind: input, shape index: {}]
  %s2 = inlined_call_operand.vmem [shape: f32[1,1024,196], index: 2, kind: output, shape index: {}]
  %s3 = sld [smem:[#allocation0]]
  $region45: #{conv2d_1x1.1} parent=0
    _
  %s5 = ssub.s32 1, %s3
  %s6 = scalar_select 0, %s5, %s3
  $region1: #{conv2d_1x1.1} parent=0
    #allocation2 [shape = 'u8[1048576]{0}', space=vmem, size = 0x100000, scoped, tag = 'input window, operand 1']
    #allocation3 [shape = 's32[2]{0}', space=sflag, size = 0x8, scoped, tag = 'scoped memory for conv2d_1x1.1']
    %7 = vsyncpa [#allocation3], 0
    %s8 = scalar_lea.sflag [#allocation3], 1
    %9 = vsyncpa %s8, 0
    loop: start=0, step=1, limit=4
    $region2: #{conv2d_1x1.1} parent=1 // loop_pre_header
      _
    $region3: #{conv2d_1x1.1} parent=1 // loop_header
      %s11 = sphi 0, %s15
      %p12 = scmp.ge.s32.totalorder %s11, 4
      %s18 = sphi 0, %s30
      %s19 = sphi 0, %s26
      %s20 = sphi 0, %s18
      %s21 = sphi 0, %s19
      %s22 = sphi 0, %s20
      %s23 = sphi 0, %s21
      %s33 = sphi 0, %s35
      %s36 = sphi 0, %s33
      %s37 = sphi 0, %s36
      %s53 = sphi 0, %s37
      %s59 = sphi 0, %s61
      %s62 = sphi 0, %s59
      %s63 = sphi 0, %s62
      %s79 = sphi 0, %s63
      %s87 = sphi 0, %s89
      %s90 = sphi 0, %s87
      %s91 = sphi 0, %s90
      %s107 = sphi 0, %s91
    $region4: #{conv2d_1x1.1} parent=1 // loop_header_branch
      %14 = sbr.rel (%p12) target = $region8
    $region5: #{conv2d_1x1.1} parent=1 // loop_body
      %s16 = ssub.s32 %s11, 1
      %s17 = ssub.s32 %s11, 2
      %s24 = sadd.s32 1, %s19
      %p25 = scmp.ge.s32.totalorder %s24, 1
      %s26 = scalar_select %p25, 0, %s24
      %s27 = sadd.s32 1, %s18
      %s28 = scalar_select %p25, %s27, %s18
      %p29 = scmp.ge.s32.totalorder %s28, 2
      %s30 = scalar_select %p29, 0, %s28
      %s31 = ssub.s32 %s19, %s26
      %p32 = scmp.eq.s32.totalorder %s31, 0
      %s34 = sadd.s32 %s33, 1
      %s35 = scalar_select %p32, %s33, %s34
      %p38 = pneg %p32
      %p39 = scmp.eq.s32.totalorder %s11, 1
      %p40 = por %p38, %p39
      %p41 = scmp.ne.s32.totalorder %s33, %s36
      %p42 = scmp.eq.s32.totalorder %s11, 0
      %p43 = por %p41, %p42
      %p44 = scmp.ne.s32.totalorder %s33, %s36
      %p45 = scmp.eq.s32.totalorder %s16, 1
      %p46 = por %p44, %p45
      %p47 = scmp.ne.s32.totalorder %s36, %s37
      %p48 = scmp.eq.s32.totalorder %s16, 0
      %p49 = por %p47, %p48
      %p50 = scmp.ne.s32.totalorder %s36, %s37
      %p51 = scmp.eq.s32.totalorder %s17, 1
      %p52 = por %p50, %p51
      %p54 = scmp.ne.s32.totalorder %s37, %s53
      %p55 = scmp.eq.s32.totalorder %s17, 0
      %p56 = por %p54, %p55
      %s57 = ssub.s32 %s18, %s30
      %p58 = scmp.eq.s32.totalorder %s57, 0
      %s60 = sadd.s32 %s59, 1
      %s61 = scalar_select %p58, %s59, %s60
      %p64 = pneg %p58
      %p65 = scmp.eq.s32.totalorder %s11, 1
      %p66 = por %p64, %p65
      %p67 = scmp.ne.s32.totalorder %s59, %s62
      %p68 = scmp.eq.s32.totalorder %s11, 0
      %p69 = por %p67, %p68
      %p70 = scmp.ne.s32.totalorder %s59, %s62
      %p71 = scmp.eq.s32.totalorder %s16, 1
      %p72 = por %p70, %p71
      %p73 = scmp.ne.s32.totalorder %s62, %s63
      %p74 = scmp.eq.s32.totalorder %s16, 0
      %p75 = por %p73, %p74
      %p76 = scmp.ne.s32.totalorder %s62, %s63
      %p77 = scmp.eq.s32.totalorder %s17, 1
      %p78 = por %p76, %p77
      %p80 = scmp.ne.s32.totalorder %s63, %s79
      %p81 = scmp.eq.s32.totalorder %s17, 0
      %p82 = por %p80, %p81
      %s83 = ssub.s32 %s19, %s26
      %s84 = ssub.s32 %s18, %s30
      %s85 = sor.u32 %s83, %s84
      %p86 = scmp.eq.s32.totalorder %s85, 0
      %s88 = sadd.s32 %s87, 1
      %s89 = scalar_select %p86, %s87, %s88
      %p92 = pneg %p86
      %p93 = scmp.eq.s32.totalorder %s11, 1
      %p94 = por %p92, %p93
      %p95 = scmp.ne.s32.totalorder %s87, %s90
      %p96 = scmp.eq.s32.totalorder %s11, 0
      %p97 = por %p95, %p96
      %p98 = scmp.ne.s32.totalorder %s87, %s90
      %p99 = scmp.eq.s32.totalorder %s16, 1
      %p100 = por %p98, %p99
      %p101 = scmp.ne.s32.totalorder %s90, %s91
      %p102 = scmp.eq.s32.totalorder %s16, 0
      %p103 = por %p101, %p102
      %p104 = scmp.ne.s32.totalorder %s90, %s91
      %p105 = scmp.eq.s32.totalorder %s17, 1
      %p106 = por %p104, %p105
      %p108 = scmp.ne.s32.totalorder %s91, %s107
      %p109 = scmp.eq.s32.totalorder %s17, 0
      %p110 = por %p108, %p109
      %p111 = scmp.le.s32.totalorder 1, %s11
      %p112 = scmp.lt.s32.totalorder %s11, 3
      %p113 = pnand %p111, %p112
      %p114 = pneg %p113
      // Predicated region
      $region9: #{conv2d_1x1.1} parent=5 // pred_check
        _
      $region10: #{conv2d_1x1.1} parent=5 // pred_check_branch
        %116 = sbr.rel (%p113) target = $region12
      $region11: #{conv2d_1x1.1} parent=5 // pred_region
        %s117 = ssub.s32 %s11, 1
        // Predicated region
        $region13: #{conv2d_1x1.1} parent=11 // pred_check
          %p118 = pneg %p49
        $region14: #{conv2d_1x1.1} parent=11 // pred_check_branch
          %120 = sbr.rel (%p118) target = $region16
        $region15: #{conv2d_1x1.1} parent=11 // pred_region
          %p121 = scmp.lt.s32.totalorder %s21, 0
          %s122 = scalar_select %p121, %s21, 0
          %s123 = smul.addr %s122, 128
          %s124 = smul.addr %s123, 8
          %s125 = scalar_lea.vmem %s0, %s124
        $region16: #{conv2d_1x1.1} parent=11 // pred_fallthru
          _
      $region12: #{conv2d_1x1.1} parent=5 // pred_fallthru
        _
      %p126 = scmp.lt.s32.totalorder %s11, 2
      // Predicated region
      $region17: #{conv2d_1x1.1} parent=5 // pred_check
        %p127 = pneg %p126
      $region18: #{conv2d_1x1.1} parent=5 // pred_check_branch
        %129 = sbr.rel (%p127) target = $region20
      $region19: #{conv2d_1x1.1} parent=5 // pred_region
        // Predicated region
        $region21: #{conv2d_1x1.1} parent=19 // pred_check
          %p130 = pneg %p69
        $region22: #{conv2d_1x1.1} parent=19 // pred_check_branch
          %132 = sbr.rel (%p130) target = $region24
        $region23: #{conv2d_1x1.1} parent=19 // pred_region
          %s133 = sand.u32 %s59, 1
          %s134 = scalar_lea.sflag [#allocation3], %s133
          %s135 = sand.u32 %s59, 1
          %s136 = smul.addr %s135, 1024
          %s137 = scalar_lea.vmem [#allocation2], %s136
          %s138 = smul.u32 64, %s18
          %s140 = ssub.s32 16384, 16384
          %141 = vsyncadd %s134, %s140
          %s142 = smul.addr %s138, 4
          %s143 = smul.addr %s142, 64
          %s144 = scalar_lea.hbm %s1, %s143
          %s145 = sshll.u32 %s137, 4
          %s146 = int_to_ptr.vmem [resolvable:$true] %s145
          %151 = dma.hbm_to_vmem [thread:$0]  %s144, 16384, %s146, %s134, 256, 256, 16
        $region24: #{conv2d_1x1.1} parent=19 // pred_fallthru
          _
      $region20: #{conv2d_1x1.1} parent=5 // pred_fallthru
        _
      %p152 = scmp.le.s32.totalorder 1, %s11
      %p153 = scmp.lt.s32.totalorder %s11, 3
      %p154 = pnand %p152, %p153
      %p155 = pneg %p154
      // Predicated region
      $region25: #{conv2d_1x1.1} parent=5 // pred_check
        _
      $region26: #{conv2d_1x1.1} parent=5 // pred_check_branch
        %157 = sbr.rel (%p154) target = $region28
      $region27: #{conv2d_1x1.1} parent=5 // pred_region
        %s158 = ssub.s32 %s11, 1
        %s159 = sand.u32 %s62, 1
        %s160 = scalar_lea.sflag [#allocation3], %s159
        %s161 = sand.u32 %s62, 1
        %s162 = smul.addr %s161, 1024
        %s163 = scalar_lea.vmem [#allocation2], %s162
        // Predicated region
        $region29: #{conv2d_1x1.1} parent=27 // pred_check
          %p164 = pneg %p75
        $region30: #{conv2d_1x1.1} parent=27 // pred_check_branch
          %166 = sbr.rel (%p164) target = $region32
        $region31: #{conv2d_1x1.1} parent=27 // pred_region
          %167 = dma.done %s160, 16384
        $region32: #{conv2d_1x1.1} parent=27 // pred_fallthru
          _
        %p168 = scmp.lt.s32.totalorder %s21, 0
        %s169 = scalar_select %p168, %s21, 0
        %s170 = smul.addr %s169, 128
        %s171 = smul.addr %s170, 8
        %s172 = scalar_lea.vmem %s0, %s171
        %p173 = pneg %p49
        %p174 = pneg %p46
        %s175 = sand.u32 %s62, 1
        %s176 = scalar_lea.sflag [#allocation3], %s175
        %s177 = sand.u32 %s62, 1
        %s178 = smul.addr %s177, 1024
        %s179 = scalar_lea.vmem [#allocation2], %s178
        %p180 = pneg %p75
        %p181 = pneg %p72
        %p182 = pneg %p103
        %p183 = pneg %p100
        %s184 = smul.u32 64, %s20
        %p185 = scmp.lt.s32.totalorder %s21, 0
        %s186 = scalar_select %p185, %s21, 0
        %p187 = scmp.lt.s32.totalorder %s184, 127
        %s188 = scalar_select %p187, %s184, 127
        %s189 = smul.addr %s188, 2
        %s190 = smul.addr %s186, 256
        %s191 = sadd.s32 %s189, %s190
        %s192 = smul.addr %s191, 8
        %s193 = scalar_lea.vmem %s2, %s192
        %p194 = scmp.lt.s32.totalorder %s21, 0
        %s195 = scalar_select %p194, %s21, 0
        %s196 = smul.addr %s195, 128
        %s197 = smul.addr %s196, 8
        %s198 = scalar_lea.vmem %s0, %s197
        %s199 = smul.u32 64, %s20
        %s200 = smul.u32 64, %s20
        %p201 = scmp.lt.s32.totalorder %s21, 0
        %s202 = scalar_select %p201, %s21, 0
        %p203 = scmp.lt.s32.totalorder %s200, 127
        %s204 = scalar_select %p203, %s200, 127
        %s205 = smul.addr %s204, 2
        %s206 = smul.addr %s202, 256
        %s207 = sadd.s32 %s205, %s206
        %s208 = smul.addr %s207, 8
        %s209 = scalar_lea.vmem %s2, %s208
        %s210 = smul.u32 64, %s20
        %v211 = vld [vmem:[%s198] sm:$0xff]
        %v212 = vld [vmem:[%s198 + $0x8] sm:$0xff]
        %v213 = vld [vmem:[%s198 + $0x10] sm:$0xff]
        %v214 = vld [vmem:[%s198 + $0x18] sm:$0xff]
        %v215 = vld [vmem:[%s198 + $0x20] sm:$0xff]
        %v216 = vld [vmem:[%s198 + $0x28] sm:$0xff]
        %v217 = vld [vmem:[%s198 + $0x30] sm:$0xff]
        %v218 = vld [vmem:[%s198 + $0x38] sm:$0xff]
        %v219 = vld [vmem:[%s198 + $0x40] sm:$0xff]
        %v220 = vld [vmem:[%s198 + $0x48] sm:$0xff]
        %v221 = vld [vmem:[%s198 + $0x50] sm:$0xff]
        %v222 = vld [vmem:[%s198 + $0x58] sm:$0xff]
        %v223 = vld [vmem:[%s198 + $0x60] sm:$0xff]
        %v224 = vld [vmem:[%s198 + $0x68] sm:$0xff]
        %v225 = vld [vmem:[%s198 + $0x70] sm:$0xff]
        %v226 = vld [vmem:[%s198 + $0x78] sm:$0xff]
        %v227 = vld [vmem:[%s198 + $0x80] sm:$0xff]
        %v228 = vld [vmem:[%s198 + $0x88] sm:$0xff]
        %v229 = vld [vmem:[%s198 + $0x90] sm:$0xff]
        %v230 = vld [vmem:[%s198 + $0x98] sm:$0xff]
        %v231 = vld [vmem:[%s198 + $0xa0] sm:$0xff]
        %v232 = vld [vmem:[%s198 + $0xa8] sm:$0xff]
        %v233 = vld [vmem:[%s198 + $0xb0] sm:$0xff]
        %v234 = vld [vmem:[%s198 + $0xb8] sm:$0xff]
        %v235 = vld [vmem:[%s198 + $0xc0] sm:$0xff]
        %v236 = vld [vmem:[%s198 + $0xc8] sm:$0xff]
        %v237 = vld [vmem:[%s198 + $0xd0] sm:$0xff]
        %v238 = vld [vmem:[%s198 + $0xd8] sm:$0xff]
        %v239 = vld [vmem:[%s198 + $0xe0] sm:$0xff]
        %v240 = vld [vmem:[%s198 + $0xe8] sm:$0xff]
        %v241 = vld [vmem:[%s198 + $0xf0] sm:$0xff]
        %v242 = vld [vmem:[%s198 + $0xf8] sm:$0xff]
        %v243 = vld [vmem:[%s198 + $0x100] sm:$0xff]
        %v244 = vld [vmem:[%s198 + $0x108] sm:$0xff]
        %v245 = vld [vmem:[%s198 + $0x110] sm:$0xff]
        %v246 = vld [vmem:[%s198 + $0x118] sm:$0xff]
        %v247 = vld [vmem:[%s198 + $0x120] sm:$0xff]
        %v248 = vld [vmem:[%s198 + $0x128] sm:$0xff]
        %v249 = vld [vmem:[%s198 + $0x130] sm:$0xff]
        %v250 = vld [vmem:[%s198 + $0x138] sm:$0xff]
        %v251 = vld [vmem:[%s198 + $0x140] sm:$0xff]
        %v252 = vld [vmem:[%s198 + $0x148] sm:$0xff]
        %v253 = vld [vmem:[%s198 + $0x150] sm:$0xff]
        %v254 = vld [vmem:[%s198 + $0x158] sm:$0xff]
        %v255 = vld [vmem:[%s198 + $0x160] sm:$0xff]
        %v256 = vld [vmem:[%s198 + $0x168] sm:$0xff]
        %v257 = vld [vmem:[%s198 + $0x170] sm:$0xff]
        %v258 = vld [vmem:[%s198 + $0x178] sm:$0xff]
        %v259 = vld [vmem:[%s198 + $0x180] sm:$0xff]
        %v260 = vld [vmem:[%s198 + $0x188] sm:$0xff]
        %v261 = vld [vmem:[%s198 + $0x190] sm:$0xff]
        %v262 = vld [vmem:[%s198 + $0x198] sm:$0xff]
        %v263 = vld [vmem:[%s198 + $0x1a0] sm:$0xff]
        %v264 = vld [vmem:[%s198 + $0x1a8] sm:$0xff]
        %v265 = vld [vmem:[%s198 + $0x1b0] sm:$0xff]
        %v266 = vld [vmem:[%s198 + $0x1b8] sm:$0xff]
        %v267 = vld [vmem:[%s198 + $0x1c0] sm:$0xff]
        %v268 = vld [vmem:[%s198 + $0x1c8] sm:$0xff]
        %v269 = vld [vmem:[%s198 + $0x1d0] sm:$0xff]
        %v270 = vld [vmem:[%s198 + $0x1d8] sm:$0xff]
        %v271 = vld [vmem:[%s198 + $0x1e0] sm:$0xff]
        %v272 = vld [vmem:[%s198 + $0x1e8] sm:$0xff]
        %v273 = vld [vmem:[%s198 + $0x1f0] sm:$0xff]
        %v274 = vld [vmem:[%s198 + $0x1f8] sm:$0xff]
        %v275 = vld [vmem:[%s198 + $0x200] sm:$0xff]
        %v276 = vld [vmem:[%s198 + $0x208] sm:$0xff]
        %v277 = vld [vmem:[%s198 + $0x210] sm:$0xff]
        %v278 = vld [vmem:[%s198 + $0x218] sm:$0xff]
        %v279 = vld [vmem:[%s198 + $0x220] sm:$0xff]
        %v280 = vld [vmem:[%s198 + $0x228] sm:$0xff]
        %v281 = vld [vmem:[%s198 + $0x230] sm:$0xff]
        %v282 = vld [vmem:[%s198 + $0x238] sm:$0xff]
        %v283 = vld [vmem:[%s198 + $0x240] sm:$0xff]
        %v284 = vld [vmem:[%s198 + $0x248] sm:$0xff]
        %v285 = vld [vmem:[%s198 + $0x250] sm:$0xff]
        %v286 = vld [vmem:[%s198 + $0x258] sm:$0xff]
        %v287 = vld [vmem:[%s198 + $0x260] sm:$0xff]
        %v288 = vld [vmem:[%s198 + $0x268] sm:$0xff]
        %v289 = vld [vmem:[%s198 + $0x270] sm:$0xff]
        %v290 = vld [vmem:[%s198 + $0x278] sm:$0xff]
        %v291 = vld [vmem:[%s198 + $0x280] sm:$0xff]
        %v292 = vld [vmem:[%s198 + $0x288] sm:$0xff]
        %v293 = vld [vmem:[%s198 + $0x290] sm:$0xff]
        %v294 = vld [vmem:[%s198 + $0x298] sm:$0xff]
        %v295 = vld [vmem:[%s198 + $0x2a0] sm:$0xff]
        %v296 = vld [vmem:[%s198 + $0x2a8] sm:$0xff]
        %v297 = vld [vmem:[%s198 + $0x2b0] sm:$0xff]
        %v298 = vld [vmem:[%s198 + $0x2b8] sm:$0xff]
        %v299 = vld [vmem:[%s198 + $0x2c0] sm:$0xff]
        %v300 = vld [vmem:[%s198 + $0x2c8] sm:$0xff]
        %v301 = vld [vmem:[%s198 + $0x2d0] sm:$0xff]
        %v302 = vld [vmem:[%s198 + $0x2d8] sm:$0xff]
        %v303 = vld [vmem:[%s198 + $0x2e0] sm:$0xff]
        %v304 = vld [vmem:[%s198 + $0x2e8] sm:$0xff]
        %v305 = vld [vmem:[%s198 + $0x2f0] sm:$0xff]
        %v306 = vld [vmem:[%s198 + $0x2f8] sm:$0xff]
        %v307 = vld [vmem:[%s198 + $0x300] sm:$0xff]
        %v308 = vld [vmem:[%s198 + $0x308] sm:$0xff]
        %v309 = vld [vmem:[%s198 + $0x310] sm:$0xff]
        %v310 = vld [vmem:[%s198 + $0x318] sm:$0xff]
        %v311 = vld [vmem:[%s198 + $0x320] sm:$0xff]
        %v312 = vld [vmem:[%s198 + $0x328] sm:$0xff]
        %v313 = vld [vmem:[%s198 + $0x330] sm:$0xff]
        %v314 = vld [vmem:[%s198 + $0x338] sm:$0xff]
        %v315 = vld [vmem:[%s198 + $0x340] sm:$0xff]
        %v316 = vld [vmem:[%s198 + $0x348] sm:$0xff]
        %v317 = vld [vmem:[%s198 + $0x350] sm:$0xff]
        %v318 = vld [vmem:[%s198 + $0x358] sm:$0xff]
        %v319 = vld [vmem:[%s198 + $0x360] sm:$0xff]
        %v320 = vld [vmem:[%s198 + $0x368] sm:$0xff]
        %v321 = vld [vmem:[%s198 + $0x370] sm:$0xff]
        %v322 = vld [vmem:[%s198 + $0x378] sm:$0xff]
        %v323 = vld [vmem:[%s198 + $0x380] sm:$0xff]
        %v324 = vld [vmem:[%s198 + $0x388] sm:$0xff]
        %v325 = vld [vmem:[%s198 + $0x390] sm:$0xff]
        %v326 = vld [vmem:[%s198 + $0x398] sm:$0xff]
        %v327 = vld [vmem:[%s198 + $0x3a0] sm:$0xff]
        %v328 = vld [vmem:[%s198 + $0x3a8] sm:$0xff]
        %v329 = vld [vmem:[%s198 + $0x3b0] sm:$0xff]
        %v330 = vld [vmem:[%s198 + $0x3b8] sm:$0xff]
        %v331 = vld [vmem:[%s198 + $0x3c0] sm:$0xff]
        %v332 = vld [vmem:[%s198 + $0x3c8] sm:$0xff]
        %v333 = vld [vmem:[%s198 + $0x3d0] sm:$0xff]
        %v334 = vld [vmem:[%s198 + $0x3d8] sm:$0xff]
        %v335 = vld [vmem:[%s198 + $0x3e0] sm:$0xff]
        %v336 = vld [vmem:[%s198 + $0x3e8] sm:$0xff]
        %v337 = vld [vmem:[%s198 + $0x3f0] sm:$0xff]
        %v338 = vld [vmem:[%s198 + $0x3f8] sm:$0xff]
        %v339 = vpack.c.bf16 %v213, %v211
        %v340 = vpack.c.bf16 %v214, %v212
        %v341 = vpack.c.bf16 %v217, %v215
        %v342 = vpack.c.bf16 %v218, %v216
        %v343 = vpack.c.bf16 %v221, %v219
        %v344 = vpack.c.bf16 %v222, %v220
        %v345 = vpack.c.bf16 %v225, %v223
        %v346 = vpack.c.bf16 %v226, %v224
        %v347 = vpack.c.bf16 %v229, %v227
        %v348 = vpack.c.bf16 %v230, %v228
        %v349 = vpack.c.bf16 %v233, %v231
        %v350 = vpack.c.bf16 %v234, %v232
        %v351 = vpack.c.bf16 %v237, %v235
        %v352 = vpack.c.bf16 %v238, %v236
        %v353 = vpack.c.bf16 %v241, %v239
        %v354 = vpack.c.bf16 %v242, %v240
        %v355 = vpack.c.bf16 %v245, %v243
        %v356 = vpack.c.bf16 %v246, %v244
        %v357 = vpack.c.bf16 %v249, %v247
        %v358 = vpack.c.bf16 %v250, %v248
        %v359 = vpack.c.bf16 %v253, %v251
        %v360 = vpack.c.bf16 %v254, %v252
        %v361 = vpack.c.bf16 %v257, %v255
        %v362 = vpack.c.bf16 %v258, %v256
        %v363 = vpack.c.bf16 %v261, %v259
        %v364 = vpack.c.bf16 %v262, %v260
        %v365 = vpack.c.bf16 %v265, %v263
        %v366 = vpack.c.bf16 %v266, %v264
        %v367 = vpack.c.bf16 %v269, %v267
        %v368 = vpack.c.bf16 %v270, %v268
        %v369 = vpack.c.bf16 %v273, %v271
        %v370 = vpack.c.bf16 %v274, %v272
        %v371 = vpack.c.bf16 %v277, %v275
        %v372 = vpack.c.bf16 %v278, %v276
        %v373 = vpack.c.bf16 %v281, %v279
        %v374 = vpack.c.bf16 %v282, %v280
        %v375 = vpack.c.bf16 %v285, %v283
        %v376 = vpack.c.bf16 %v286, %v284
        %v377 = vpack.c.bf16 %v289, %v287
        %v378 = vpack.c.bf16 %v290, %v288
        %v379 = vpack.c.bf16 %v293, %v291
        %v380 = vpack.c.bf16 %v294, %v292
        %v381 = vpack.c.bf16 %v297, %v295
        %v382 = vpack.c.bf16 %v298, %v296
        %v383 = vpack.c.bf16 %v301, %v299
        %v384 = vpack.c.bf16 %v302, %v300
        %v385 = vpack.c.bf16 %v305, %v303
        %v386 = vpack.c.bf16 %v306, %v304
        %v387 = vpack.c.bf16 %v309, %v307
        %v388 = vpack.c.bf16 %v310, %v308
        %v389 = vpack.c.bf16 %v313, %v311
        %v390 = vpack.c.bf16 %v314, %v312
        %v391 = vpack.c.bf16 %v317, %v315
        %v392 = vpack.c.bf16 %v318, %v316
        %v393 = vpack.c.bf16 %v321, %v319
        %v394 = vpack.c.bf16 %v322, %v320
        %v395 = vpack.c.bf16 %v325, %v323
        %v396 = vpack.c.bf16 %v326, %v324
        %v397 = vpack.c.bf16 %v329, %v327
        %v398 = vpack.c.bf16 %v330, %v328
        %v399 = vpack.c.bf16 %v333, %v331
        %v400 = vpack.c.bf16 %v334, %v332
        %v401 = vpack.c.bf16 %v337, %v335
        %v402 = vpack.c.bf16 %v338, %v336
        %v403 = vld [vmem:[%s163] sm:$0xff]
        %v404 = vld [vmem:[%s163 + $0x8] sm:$0xff]
        %v405 = vld [vmem:[%s163 + $0x10] sm:$0xff]
        %v406 = vld [vmem:[%s163 + $0x18] sm:$0xff]
        %v407 = vld [vmem:[%s163 + $0x20] sm:$0xff]
        %v408 = vld [vmem:[%s163 + $0x28] sm:$0xff]
        %v409 = vld [vmem:[%s163 + $0x30] sm:$0xff]
        %v410 = vld [vmem:[%s163 + $0x38] sm:$0xff]
        %v411 = vld [vmem:[%s163 + $0x40] sm:$0xff]
        %v412 = vld [vmem:[%s163 + $0x48] sm:$0xff]
        %v413 = vld [vmem:[%s163 + $0x50] sm:$0xff]
        %v414 = vld [vmem:[%s163 + $0x58] sm:$0xff]
        %v415 = vld [vmem:[%s163 + $0x60] sm:$0xff]
        %v416 = vld [vmem:[%s163 + $0x68] sm:$0xff]
        %v417 = vld [vmem:[%s163 + $0x70] sm:$0xff]
        %v418 = vld [vmem:[%s163 + $0x78] sm:$0xff]
        %v419 = vld [vmem:[%s163 + $0x80] sm:$0xff]
        %v420 = vld [vmem:[%s163 + $0x88] sm:$0xff]
        %v421 = vld [vmem:[%s163 + $0x90] sm:$0xff]
        %v422 = vld [vmem:[%s163 + $0x98] sm:$0xff]
        %v423 = vld [vmem:[%s163 + $0xa0] sm:$0xff]
        %v424 = vld [vmem:[%s163 + $0xa8] sm:$0xff]
        %v425 = vld [vmem:[%s163 + $0xb0] sm:$0xff]
        %v426 = vld [vmem:[%s163 + $0xb8] sm:$0xff]
        %v427 = vld [vmem:[%s163 + $0xc0] sm:$0xff]
        %v428 = vld [vmem:[%s163 + $0xc8] sm:$0xff]
        %v429 = vld [vmem:[%s163 + $0xd0] sm:$0xff]
        %v430 = vld [vmem:[%s163 + $0xd8] sm:$0xff]
        %v431 = vld [vmem:[%s163 + $0xe0] sm:$0xff]
        %v432 = vld [vmem:[%s163 + $0xe8] sm:$0xff]
        %v433 = vld [vmem:[%s163 + $0xf0] sm:$0xff]
        %v434 = vld [vmem:[%s163 + $0xf8] sm:$0xff]
        %v435 = vld [vmem:[%s163 + $0x100] sm:$0xff]
        %v436 = vld [vmem:[%s163 + $0x108] sm:$0xff]
        %v437 = vld [vmem:[%s163 + $0x110] sm:$0xff]
        %v438 = vld [vmem:[%s163 + $0x118] sm:$0xff]
        %v439 = vld [vmem:[%s163 + $0x120] sm:$0xff]
        %v440 = vld [vmem:[%s163 + $0x128] sm:$0xff]
        %v441 = vld [vmem:[%s163 + $0x130] sm:$0xff]
        %v442 = vld [vmem:[%s163 + $0x138] sm:$0xff]
        %v443 = vld [vmem:[%s163 + $0x140] sm:$0xff]
        %v444 = vld [vmem:[%s163 + $0x148] sm:$0xff]
        %v445 = vld [vmem:[%s163 + $0x150] sm:$0xff]
        %v446 = vld [vmem:[%s163 + $0x158] sm:$0xff]
        %v447 = vld [vmem:[%s163 + $0x160] sm:$0xff]
        %v448 = vld [vmem:[%s163 + $0x168] sm:$0xff]
        %v449 = vld [vmem:[%s163 + $0x170] sm:$0xff]
        %v450 = vld [vmem:[%s163 + $0x178] sm:$0xff]
        %v451 = vld [vmem:[%s163 + $0x180] sm:$0xff]
        %v452 = vld [vmem:[%s163 + $0x188] sm:$0xff]
        %v453 = vld [vmem:[%s163 + $0x190] sm:$0xff]
        %v454 = vld [vmem:[%s163 + $0x198] sm:$0xff]
        %v455 = vld [vmem:[%s163 + $0x1a0] sm:$0xff]
        %v456 = vld [vmem:[%s163 + $0x1a8] sm:$0xff]
        %v457 = vld [vmem:[%s163 + $0x1b0] sm:$0xff]
        %v458 = vld [vmem:[%s163 + $0x1b8] sm:$0xff]
        %v459 = vld [vmem:[%s163 + $0x1c0] sm:$0xff]
        %v460 = vld [vmem:[%s163 + $0x1c8] sm:$0xff]
        %v461 = vld [vmem:[%s163 + $0x1d0] sm:$0xff]
        %v462 = vld [vmem:[%s163 + $0x1d8] sm:$0xff]
        %v463 = vld [vmem:[%s163 + $0x1e0] sm:$0xff]
        %v464 = vld [vmem:[%s163 + $0x1e8] sm:$0xff]
        %v465 = vld [vmem:[%s163 + $0x1f0] sm:$0xff]
        %v466 = vld [vmem:[%s163 + $0x1f8] sm:$0xff]
        %v467 = vld [vmem:[%s163 + $0x200] sm:$0xff]
        %v468 = vld [vmem:[%s163 + $0x208] sm:$0xff]
        %v469 = vld [vmem:[%s163 + $0x210] sm:$0xff]
        %v470 = vld [vmem:[%s163 + $0x218] sm:$0xff]
        %v471 = vld [vmem:[%s163 + $0x220] sm:$0xff]
        %v472 = vld [vmem:[%s163 + $0x228] sm:$0xff]
        %v473 = vld [vmem:[%s163 + $0x230] sm:$0xff]
        %v474 = vld [vmem:[%s163 + $0x238] sm:$0xff]
        %v475 = vld [vmem:[%s163 + $0x240] sm:$0xff]
        %v476 = vld [vmem:[%s163 + $0x248] sm:$0xff]
        %v477 = vld [vmem:[%s163 + $0x250] sm:$0xff]
        %v478 = vld [vmem:[%s163 + $0x258] sm:$0xff]
        %v479 = vld [vmem:[%s163 + $0x260] sm:$0xff]
        %v480 = vld [vmem:[%s163 + $0x268] sm:$0xff]
        %v481 = vld [vmem:[%s163 + $0x270] sm:$0xff]
        %v482 = vld [vmem:[%s163 + $0x278] sm:$0xff]
        %v483 = vld [vmem:[%s163 + $0x280] sm:$0xff]
        %v484 = vld [vmem:[%s163 + $0x288] sm:$0xff]
        %v485 = vld [vmem:[%s163 + $0x290] sm:$0xff]
        %v486 = vld [vmem:[%s163 + $0x298] sm:$0xff]
        %v487 = vld [vmem:[%s163 + $0x2a0] sm:$0xff]
        %v488 = vld [vmem:[%s163 + $0x2a8] sm:$0xff]
        %v489 = vld [vmem:[%s163 + $0x2b0] sm:$0xff]
        %v490 = vld [vmem:[%s163 + $0x2b8] sm:$0xff]
        %v491 = vld [vmem:[%s163 + $0x2c0] sm:$0xff]
        %v492 = vld [vmem:[%s163 + $0x2c8] sm:$0xff]
        %v493 = vld [vmem:[%s163 + $0x2d0] sm:$0xff]
        %v494 = vld [vmem:[%s163 + $0x2d8] sm:$0xff]
        %v495 = vld [vmem:[%s163 + $0x2e0] sm:$0xff]
        %v496 = vld [vmem:[%s163 + $0x2e8] sm:$0xff]
        %v497 = vld [vmem:[%s163 + $0x2f0] sm:$0xff]
        %v498 = vld [vmem:[%s163 + $0x2f8] sm:$0xff]
        %v499 = vld [vmem:[%s163 + $0x300] sm:$0xff]
        %v500 = vld [vmem:[%s163 + $0x308] sm:$0xff]
        %v501 = vld [vmem:[%s163 + $0x310] sm:$0xff]
        %v502 = vld [vmem:[%s163 + $0x318] sm:$0xff]
        %v503 = vld [vmem:[%s163 + $0x320] sm:$0xff]
        %v504 = vld [vmem:[%s163 + $0x328] sm:$0xff]
        %v505 = vld [vmem:[%s163 + $0x330] sm:$0xff]
        %v506 = vld [vmem:[%s163 + $0x338] sm:$0xff]
        %v507 = vld [vmem:[%s163 + $0x340] sm:$0xff]
        %v508 = vld [vmem:[%s163 + $0x348] sm:$0xff]
        %v509 = vld [vmem:[%s163 + $0x350] sm:$0xff]
        %v510 = vld [vmem:[%s163 + $0x358] sm:$0xff]
        %v511 = vld [vmem:[%s163 + $0x360] sm:$0xff]
        %v512 = vld [vmem:[%s163 + $0x368] sm:$0xff]
        %v513 = vld [vmem:[%s163 + $0x370] sm:$0xff]
        %v514 = vld [vmem:[%s163 + $0x378] sm:$0xff]
        %v515 = vld [vmem:[%s163 + $0x380] sm:$0xff]
        %v516 = vld [vmem:[%s163 + $0x388] sm:$0xff]
        %v517 = vld [vmem:[%s163 + $0x390] sm:$0xff]
        %v518 = vld [vmem:[%s163 + $0x398] sm:$0xff]
        %v519 = vld [vmem:[%s163 + $0x3a0] sm:$0xff]
        %v520 = vld [vmem:[%s163 + $0x3a8] sm:$0xff]
        %v521 = vld [vmem:[%s163 + $0x3b0] sm:$0xff]
        %v522 = vld [vmem:[%s163 + $0x3b8] sm:$0xff]
        %v523 = vld [vmem:[%s163 + $0x3c0] sm:$0xff]
        %v524 = vld [vmem:[%s163 + $0x3c8] sm:$0xff]
        %v525 = vld [vmem:[%s163 + $0x3d0] sm:$0xff]
        %v526 = vld [vmem:[%s163 + $0x3d8] sm:$0xff]
        %v527 = vld [vmem:[%s163 + $0x3e0] sm:$0xff]
        %v528 = vld [vmem:[%s163 + $0x3e8] sm:$0xff]
        %v529 = vld [vmem:[%s163 + $0x3f0] sm:$0xff]
        %v530 = vld [vmem:[%s163 + $0x3f8] sm:$0xff]
        %v659 = vunpack.c.l.b16 %v403
        %v660 = vunpack.c.h.b16 %v403
        %v661 = vunpack.c.l.b16 %v404
        %v662 = vunpack.c.h.b16 %v404
        %v663 = vunpack.c.l.b16 %v405
        %v664 = vunpack.c.h.b16 %v405
        %v665 = vunpack.c.l.b16 %v406
        %v666 = vunpack.c.h.b16 %v406
        %v667 = vunpack.c.l.b16 %v407
        %v668 = vunpack.c.h.b16 %v407
        %v669 = vunpack.c.l.b16 %v408
        %v670 = vunpack.c.h.b16 %v408
        %v671 = vunpack.c.l.b16 %v409
        %v672 = vunpack.c.h.b16 %v409
        %v673 = vunpack.c.l.b16 %v410
        %v674 = vunpack.c.h.b16 %v410
        %v675 = vunpack.c.l.b16 %v411
        %v676 = vunpack.c.h.b16 %v411
        %v677 = vunpack.c.l.b16 %v412
        %v678 = vunpack.c.h.b16 %v412
        %v679 = vunpack.c.l.b16 %v413
        %v680 = vunpack.c.h.b16 %v413
        %v681 = vunpack.c.l.b16 %v414
        %v682 = vunpack.c.h.b16 %v414
        %v683 = vunpack.c.l.b16 %v415
        %v684 = vunpack.c.h.b16 %v415
        %v685 = vunpack.c.l.b16 %v416
        %v686 = vunpack.c.h.b16 %v416
        %v687 = vunpack.c.l.b16 %v417
        %v688 = vunpack.c.h.b16 %v417
        %v689 = vunpack.c.l.b16 %v418
        %v690 = vunpack.c.h.b16 %v418
        %v691 = vunpack.c.l.b16 %v419
        %v692 = vunpack.c.h.b16 %v419
        %v693 = vunpack.c.l.b16 %v420
        %v694 = vunpack.c.h.b16 %v420
        %v695 = vunpack.c.l.b16 %v421
        %v696 = vunpack.c.h.b16 %v421
        %v697 = vunpack.c.l.b16 %v422
        %v698 = vunpack.c.h.b16 %v422
        %v699 = vunpack.c.l.b16 %v423
        %v700 = vunpack.c.h.b16 %v423
        %v701 = vunpack.c.l.b16 %v424
        %v702 = vunpack.c.h.b16 %v424
        %v703 = vunpack.c.l.b16 %v425
        %v704 = vunpack.c.h.b16 %v425
        %v705 = vunpack.c.l.b16 %v426
        %v706 = vunpack.c.h.b16 %v426
        %v707 = vunpack.c.l.b16 %v427
        %v708 = vunpack.c.h.b16 %v427
        %v709 = vunpack.c.l.b16 %v428
        %v710 = vunpack.c.h.b16 %v428
        %v711 = vunpack.c.l.b16 %v429
        %v712 = vunpack.c.h.b16 %v429
        %v713 = vunpack.c.l.b16 %v430
        %v714 = vunpack.c.h.b16 %v430
        %v715 = vunpack.c.l.b16 %v431
        %v716 = vunpack.c.h.b16 %v431
        %v717 = vunpack.c.l.b16 %v432
        %v718 = vunpack.c.h.b16 %v432
        %v719 = vunpack.c.l.b16 %v433
        %v720 = vunpack.c.h.b16 %v433
        %v721 = vunpack.c.l.b16 %v434
        %v722 = vunpack.c.h.b16 %v434
        %v723 = vunpack.c.l.b16 %v435
        %v724 = vunpack.c.h.b16 %v435
        %v725 = vunpack.c.l.b16 %v436
        %v726 = vunpack.c.h.b16 %v436
        %v727 = vunpack.c.l.b16 %v437
        %v728 = vunpack.c.h.b16 %v437
        %v729 = vunpack.c.l.b16 %v438
        %v730 = vunpack.c.h.b16 %v438
        %v731 = vunpack.c.l.b16 %v439
        %v732 = vunpack.c.h.b16 %v439
        %v733 = vunpack.c.l.b16 %v440
        %v734 = vunpack.c.h.b16 %v440
        %v735 = vunpack.c.l.b16 %v441
        %v736 = vunpack.c.h.b16 %v441
        %v737 = vunpack.c.l.b16 %v442
        %v738 = vunpack.c.h.b16 %v442
        %v739 = vunpack.c.l.b16 %v443
        %v740 = vunpack.c.h.b16 %v443
        %v741 = vunpack.c.l.b16 %v444
        %v742 = vunpack.c.h.b16 %v444
        %v743 = vunpack.c.l.b16 %v445
        %v744 = vunpack.c.h.b16 %v445
        %v745 = vunpack.c.l.b16 %v446
        %v746 = vunpack.c.h.b16 %v446
        %v747 = vunpack.c.l.b16 %v447
        %v748 = vunpack.c.h.b16 %v447
        %v749 = vunpack.c.l.b16 %v448
        %v750 = vunpack.c.h.b16 %v448
        %v751 = vunpack.c.l.b16 %v449
        %v752 = vunpack.c.h.b16 %v449
        %v753 = vunpack.c.l.b16 %v450
        %v754 = vunpack.c.h.b16 %v450
        %v755 = vunpack.c.l.b16 %v451
        %v756 = vunpack.c.h.b16 %v451
        %v757 = vunpack.c.l.b16 %v452
        %v758 = vunpack.c.h.b16 %v452
        %v759 = vunpack.c.l.b16 %v453
        %v760 = vunpack.c.h.b16 %v453
        %v761 = vunpack.c.l.b16 %v454
        %v762 = vunpack.c.h.b16 %v454
        %v763 = vunpack.c.l.b16 %v455
        %v764 = vunpack.c.h.b16 %v455
        %v765 = vunpack.c.l.b16 %v456
        %v766 = vunpack.c.h.b16 %v456
        %v767 = vunpack.c.l.b16 %v457
        %v768 = vunpack.c.h.b16 %v457
        %v769 = vunpack.c.l.b16 %v458
        %v770 = vunpack.c.h.b16 %v458
        %v771 = vunpack.c.l.b16 %v459
        %v772 = vunpack.c.h.b16 %v459
        %v773 = vunpack.c.l.b16 %v460
        %v774 = vunpack.c.h.b16 %v460
        %v775 = vunpack.c.l.b16 %v461
        %v776 = vunpack.c.h.b16 %v461
        %v777 = vunpack.c.l.b16 %v462
        %v778 = vunpack.c.h.b16 %v462
        %v779 = vunpack.c.l.b16 %v463
        %v780 = vunpack.c.h.b16 %v463
        %v781 = vunpack.c.l.b16 %v464
        %v782 = vunpack.c.h.b16 %v464
        %v783 = vunpack.c.l.b16 %v465
        %v784 = vunpack.c.h.b16 %v465
        %v785 = vunpack.c.l.b16 %v466
        %v786 = vunpack.c.h.b16 %v466
        %v787 = vunpack.c.l.b16 %v467
        %v788 = vunpack.c.h.b16 %v467
        %v789 = vunpack.c.l.b16 %v468
        %v790 = vunpack.c.h.b16 %v468
        %v791 = vunpack.c.l.b16 %v469
        %v792 = vunpack.c.h.b16 %v469
        %v793 = vunpack.c.l.b16 %v470
        %v794 = vunpack.c.h.b16 %v470
        %v795 = vunpack.c.l.b16 %v471
        %v796 = vunpack.c.h.b16 %v471
        %v797 = vunpack.c.l.b16 %v472
        %v798 = vunpack.c.h.b16 %v472
        %v799 = vunpack.c.l.b16 %v473
        %v800 = vunpack.c.h.b16 %v473
        %v801 = vunpack.c.l.b16 %v474
        %v802 = vunpack.c.h.b16 %v474
        %v803 = vunpack.c.l.b16 %v475
        %v804 = vunpack.c.h.b16 %v475
        %v805 = vunpack.c.l.b16 %v476
        %v806 = vunpack.c.h.b16 %v476
        %v807 = vunpack.c.l.b16 %v477
        %v808 = vunpack.c.h.b16 %v477
        %v809 = vunpack.c.l.b16 %v478
        %v810 = vunpack.c.h.b16 %v478
        %v811 = vunpack.c.l.b16 %v479
        %v812 = vunpack.c.h.b16 %v479
        %v813 = vunpack.c.l.b16 %v480
        %v814 = vunpack.c.h.b16 %v480
        %v815 = vunpack.c.l.b16 %v481
        %v816 = vunpack.c.h.b16 %v481
        %v817 = vunpack.c.l.b16 %v482
        %v818 = vunpack.c.h.b16 %v482
        %v819 = vunpack.c.l.b16 %v483
        %v820 = vunpack.c.h.b16 %v483
        %v821 = vunpack.c.l.b16 %v484
        %v822 = vunpack.c.h.b16 %v484
        %v823 = vunpack.c.l.b16 %v485
        %v824 = vunpack.c.h.b16 %v485
        %v825 = vunpack.c.l.b16 %v486
        %v826 = vunpack.c.h.b16 %v486
        %v827 = vunpack.c.l.b16 %v487
        %v828 = vunpack.c.h.b16 %v487
        %v829 = vunpack.c.l.b16 %v488
        %v830 = vunpack.c.h.b16 %v488
        %v831 = vunpack.c.l.b16 %v489
        %v832 = vunpack.c.h.b16 %v489
        %v833 = vunpack.c.l.b16 %v490
        %v834 = vunpack.c.h.b16 %v490
        %v835 = vunpack.c.l.b16 %v491
        %v836 = vunpack.c.h.b16 %v491
        %v837 = vunpack.c.l.b16 %v492
        %v838 = vunpack.c.h.b16 %v492
        %v839 = vunpack.c.l.b16 %v493
        %v840 = vunpack.c.h.b16 %v493
        %v841 = vunpack.c.l.b16 %v494
        %v842 = vunpack.c.h.b16 %v494
        %v843 = vunpack.c.l.b16 %v495
        %v844 = vunpack.c.h.b16 %v495
        %v845 = vunpack.c.l.b16 %v496
        %v846 = vunpack.c.h.b16 %v496
        %v847 = vunpack.c.l.b16 %v497
        %v848 = vunpack.c.h.b16 %v497
        %v849 = vunpack.c.l.b16 %v498
        %v850 = vunpack.c.h.b16 %v498
        %v851 = vunpack.c.l.b16 %v499
        %v852 = vunpack.c.h.b16 %v499
        %v853 = vunpack.c.l.b16 %v500
        %v854 = vunpack.c.h.b16 %v500
        %v855 = vunpack.c.l.b16 %v501
        %v856 = vunpack.c.h.b16 %v501
        %v857 = vunpack.c.l.b16 %v502
        %v858 = vunpack.c.h.b16 %v502
        %v859 = vunpack.c.l.b16 %v503
        %v860 = vunpack.c.h.b16 %v503
        %v861 = vunpack.c.l.b16 %v504
        %v862 = vunpack.c.h.b16 %v504
        %v863 = vunpack.c.l.b16 %v505
        %v864 = vunpack.c.h.b16 %v505
        %v865 = vunpack.c.l.b16 %v506
        %v866 = vunpack.c.h.b16 %v506
        %v867 = vunpack.c.l.b16 %v507
        %v868 = vunpack.c.h.b16 %v507
        %v869 = vunpack.c.l.b16 %v508
        %v870 = vunpack.c.h.b16 %v508
        %v871 = vunpack.c.l.b16 %v509
        %v872 = vunpack.c.h.b16 %v509
        %v873 = vunpack.c.l.b16 %v510
        %v874 = vunpack.c.h.b16 %v510
        %v875 = vunpack.c.l.b16 %v511
        %v876 = vunpack.c.h.b16 %v511
        %v877 = vunpack.c.l.b16 %v512
        %v878 = vunpack.c.h.b16 %v512
        %v879 = vunpack.c.l.b16 %v513
        %v880 = vunpack.c.h.b16 %v513
        %v881 = vunpack.c.l.b16 %v514
        %v882 = vunpack.c.h.b16 %v514
        %v883 = vunpack.c.l.b16 %v515
        %v884 = vunpack.c.h.b16 %v515
        %v885 = vunpack.c.l.b16 %v516
        %v886 = vunpack.c.h.b16 %v516
        %v887 = vunpack.c.l.b16 %v517
        %v888 = vunpack.c.h.b16 %v517
        %v889 = vunpack.c.l.b16 %v518
        %v890 = vunpack.c.h.b16 %v518
        %v891 = vunpack.c.l.b16 %v519
        %v892 = vunpack.c.h.b16 %v519
        %v893 = vunpack.c.l.b16 %v520
        %v894 = vunpack.c.h.b16 %v520
        %v895 = vunpack.c.l.b16 %v521
        %v896 = vunpack.c.h.b16 %v521
        %v897 = vunpack.c.l.b16 %v522
        %v898 = vunpack.c.h.b16 %v522
        %v899 = vunpack.c.l.b16 %v523
        %v900 = vunpack.c.h.b16 %v523
        %v901 = vunpack.c.l.b16 %v524
        %v902 = vunpack.c.h.b16 %v524
        %v903 = vunpack.c.l.b16 %v525
        %v904 = vunpack.c.h.b16 %v525
        %v905 = vunpack.c.l.b16 %v526
        %v906 = vunpack.c.h.b16 %v526
        %v907 = vunpack.c.l.b16 %v527
        %v908 = vunpack.c.h.b16 %v527
        %v909 = vunpack.c.l.b16 %v528
        %v910 = vunpack.c.h.b16 %v528
        %v911 = vunpack.c.l.b16 %v529
        %v912 = vunpack.c.h.b16 %v529
        %v913 = vunpack.c.l.b16 %v530
        %v914 = vunpack.c.h.b16 %v530
        %v915 = vpack.c.b16 %v663, %v659
        %v916 = vpack.c.b16 %v664, %v660
        %v917 = vpack.c.b16 %v665, %v661
        %v918 = vpack.c.b16 %v666, %v662
        %v919 = vpack.c.b16 %v671, %v667
        %v920 = vpack.c.b16 %v672, %v668
        %v921 = vpack.c.b16 %v673, %v669
        %v922 = vpack.c.b16 %v674, %v670
        %v923 = vpack.c.b16 %v679, %v675
        %v924 = vpack.c.b16 %v680, %v676
        %v925 = vpack.c.b16 %v681, %v677
        %v926 = vpack.c.b16 %v682, %v678
        %v927 = vpack.c.b16 %v687, %v683
        %v928 = vpack.c.b16 %v688, %v684
        %v929 = vpack.c.b16 %v689, %v685
        %v930 = vpack.c.b16 %v690, %v686
        %v931 = vpack.c.b16 %v695, %v691
        %v932 = vpack.c.b16 %v696, %v692
        %v933 = vpack.c.b16 %v697, %v693
        %v934 = vpack.c.b16 %v698, %v694
        %v935 = vpack.c.b16 %v703, %v699
        %v936 = vpack.c.b16 %v704, %v700
        %v937 = vpack.c.b16 %v705, %v701
        %v938 = vpack.c.b16 %v706, %v702
        %v939 = vpack.c.b16 %v711, %v707
        %v940 = vpack.c.b16 %v712, %v708
        %v941 = vpack.c.b16 %v713, %v709
        %v942 = vpack.c.b16 %v714, %v710
        %v943 = vpack.c.b16 %v719, %v715
        %v944 = vpack.c.b16 %v720, %v716
        %v945 = vpack.c.b16 %v721, %v717
        %v946 = vpack.c.b16 %v722, %v718
        %v947 = vpack.c.b16 %v727, %v723
        %v948 = vpack.c.b16 %v728, %v724
        %v949 = vpack.c.b16 %v729, %v725
        %v950 = vpack.c.b16 %v730, %v726
        %v951 = vpack.c.b16 %v735, %v731
        %v952 = vpack.c.b16 %v736, %v732
        %v953 = vpack.c.b16 %v737, %v733
        %v954 = vpack.c.b16 %v738, %v734
        %v955 = vpack.c.b16 %v743, %v739
        %v956 = vpack.c.b16 %v744, %v740
        %v957 = vpack.c.b16 %v745, %v741
        %v958 = vpack.c.b16 %v746, %v742
        %v959 = vpack.c.b16 %v751, %v747
        %v960 = vpack.c.b16 %v752, %v748
        %v961 = vpack.c.b16 %v753, %v749
        %v962 = vpack.c.b16 %v754, %v750
        %v963 = vpack.c.b16 %v759, %v755
        %v964 = vpack.c.b16 %v760, %v756
        %v965 = vpack.c.b16 %v761, %v757
        %v966 = vpack.c.b16 %v762, %v758
        %v967 = vpack.c.b16 %v767, %v763
        %v968 = vpack.c.b16 %v768, %v764
        %v969 = vpack.c.b16 %v769, %v765
        %v970 = vpack.c.b16 %v770, %v766
        %v971 = vpack.c.b16 %v775, %v771
        %v972 = vpack.c.b16 %v776, %v772
        %v973 = vpack.c.b16 %v777, %v773
        %v974 = vpack.c.b16 %v778, %v774
        %v975 = vpack.c.b16 %v783, %v779
        %v976 = vpack.c.b16 %v784, %v780
        %v977 = vpack.c.b16 %v785, %v781
        %v978 = vpack.c.b16 %v786, %v782
        %v979 = vpack.c.b16 %v791, %v787
        %v980 = vpack.c.b16 %v792, %v788
        %v981 = vpack.c.b16 %v793, %v789
        %v982 = vpack.c.b16 %v794, %v790
        %v983 = vpack.c.b16 %v799, %v795
        %v984 = vpack.c.b16 %v800, %v796
        %v985 = vpack.c.b16 %v801, %v797
        %v986 = vpack.c.b16 %v802, %v798
        %v987 = vpack.c.b16 %v807, %v803
        %v988 = vpack.c.b16 %v808, %v804
        %v989 = vpack.c.b16 %v809, %v805
        %v990 = vpack.c.b16 %v810, %v806
        %v991 = vpack.c.b16 %v815, %v811
        %v992 = vpack.c.b16 %v816, %v812
        %v993 = vpack.c.b16 %v817, %v813
        %v994 = vpack.c.b16 %v818, %v814
        %v995 = vpack.c.b16 %v823, %v819
        %v996 = vpack.c.b16 %v824, %v820
        %v997 = vpack.c.b16 %v825, %v821
        %v998 = vpack.c.b16 %v826, %v822
        %v999 = vpack.c.b16 %v831, %v827
        %v1000 = vpack.c.b16 %v832, %v828
        %v1001 = vpack.c.b16 %v833, %v829
        %v1002 = vpack.c.b16 %v834, %v830
        %v1003 = vpack.c.b16 %v839, %v835
        %v1004 = vpack.c.b16 %v840, %v836
        %v1005 = vpack.c.b16 %v841, %v837
        %v1006 = vpack.c.b16 %v842, %v838
        %v1007 = vpack.c.b16 %v847, %v843
        %v1008 = vpack.c.b16 %v848, %v844
        %v1009 = vpack.c.b16 %v849, %v845
        %v1010 = vpack.c.b16 %v850, %v846
        %v1011 = vpack.c.b16 %v855, %v851
        %v1012 = vpack.c.b16 %v856, %v852
        %v1013 = vpack.c.b16 %v857, %v853
        %v1014 = vpack.c.b16 %v858, %v854
        %v1015 = vpack.c.b16 %v863, %v859
        %v1016 = vpack.c.b16 %v864, %v860
        %v1017 = vpack.c.b16 %v865, %v861
        %v1018 = vpack.c.b16 %v866, %v862
        %v1019 = vpack.c.b16 %v871, %v867
        %v1020 = vpack.c.b16 %v872, %v868
        %v1021 = vpack.c.b16 %v873, %v869
        %v1022 = vpack.c.b16 %v874, %v870
        %v1023 = vpack.c.b16 %v879, %v875
        %v1024 = vpack.c.b16 %v880, %v876
        %v1025 = vpack.c.b16 %v881, %v877
        %v1026 = vpack.c.b16 %v882, %v878
        %v1027 = vpack.c.b16 %v887, %v883
        %v1028 = vpack.c.b16 %v888, %v884
        %v1029 = vpack.c.b16 %v889, %v885
        %v1030 = vpack.c.b16 %v890, %v886
        %v1031 = vpack.c.b16 %v895, %v891
        %v1032 = vpack.c.b16 %v896, %v892
        %v1033 = vpack.c.b16 %v897, %v893
        %v1034 = vpack.c.b16 %v898, %v894
        %v1035 = vpack.c.b16 %v903, %v899
        %v1036 = vpack.c.b16 %v904, %v900
        %v1037 = vpack.c.b16 %v905, %v901
        %v1038 = vpack.c.b16 %v906, %v902
        %v1039 = vpack.c.b16 %v911, %v907
        %v1040 = vpack.c.b16 %v912, %v908
        %v1041 = vpack.c.b16 %v913, %v909
        %v1042 = vpack.c.b16 %v914, %v910
        %1171 = vmatprep.subr.bf16.mxu0 %v354
        %1172 = vmatpush1.bf16.msra.mxu0 %v353
        %1173 = vmatprep.subr.bf16.mxu0 %v352
        %1174 = vmatpush1.bf16.msra.mxu0 %v351
        %1175 = vmatprep.subr.bf16.mxu0 %v350
        %1176 = vmatpush1.bf16.msra.mxu0 %v349
        %1177 = vmatprep.subr.bf16.mxu0 %v348
        %1178 = vmatpush1.bf16.msra.mxu0 %v347
        %1179 = vmatprep.subr.bf16.mxu0 %v346
        %1180 = vmatpush1.bf16.msra.mxu0 %v345
        %1181 = vmatprep.subr.bf16.mxu0 %v344
        %1182 = vmatpush1.bf16.msra.mxu0 %v343
        %1183 = vmatprep.subr.bf16.mxu0 %v342
        %1184 = vmatpush1.bf16.msra.mxu0 %v341
        %1185 = vmatprep.subr.bf16.mxu0 %v340
        %1186 = vmatpush1.bf16.msra.mxu0 %v339
        %1187 = vmatprep.subr.bf16.mxu0 %v370
        %1188 = vmatpush2.bf16.msra.mxu0 %v369
        %1189 = vmatprep.subr.bf16.mxu0 %v368
        %1190 = vmatpush2.bf16.msra.mxu0 %v367
        %1191 = vmatprep.subr.bf16.mxu0 %v366
        %1192 = vmatpush2.bf16.msra.mxu0 %v365
        %1193 = vmatprep.subr.bf16.mxu0 %v364
        %1194 = vmatpush2.bf16.msra.mxu0 %v363
        %1195 = vmatprep.subr.bf16.mxu0 %v362
        %1196 = vmatpush2.bf16.msra.mxu0 %v361
        %1197 = vmatprep.subr.bf16.mxu0 %v360
        %1198 = vmatpush2.bf16.msra.mxu0 %v359
        %1199 = vmatprep.subr.bf16.mxu0 %v358
        %1200 = vmatpush2.bf16.msra.mxu0 %v357
        %1201 = vmatprep.subr.bf16.mxu0 %v356
        %1202 = vmatpush2.bf16.msra.mxu0 %v355
        %1203 = vmatprep.mubr.bf16.mxu0 %v916
        %1204 = vmatmul.mubr.bf16.gmra.mxu0 %v915
        %v1205 = vpop.f32.mrf.mxu0
        %v1206 = vadd.f32 0.0, %v1205
        %v1207 = vpop.f32.mrf.mxu0
        %v1208 = vadd.f32 0.0, %v1207
        %v1209 = vpop.f32.mrf.mxu0
        %v1210 = vadd.f32 0.0, %v1209
        %v1211 = vpop.f32.mrf.mxu0
        %v1212 = vadd.f32 0.0, %v1211
        %1213 = vmatprep.mubr.bf16.mxu0 %v920
        %1214 = vmatmul.mubr.bf16.gmra.mxu0 %v919
        %v1215 = vpop.f32.mrf.mxu0
        %v1216 = vadd.f32 0.0, %v1215
        %v1217 = vpop.f32.mrf.mxu0
        %v1218 = vadd.f32 0.0, %v1217
        %v1219 = vpop.f32.mrf.mxu0
        %v1220 = vadd.f32 0.0, %v1219
        %v1221 = vpop.f32.mrf.mxu0
        %v1222 = vadd.f32 0.0, %v1221
        %1223 = vmatprep.mubr.bf16.mxu0 %v924
        %1224 = vmatmul.mubr.bf16.gmra.mxu0 %v923
        %v1225 = vpop.f32.mrf.mxu0
        %v1226 = vadd.f32 0.0, %v1225
        %v1227 = vpop.f32.mrf.mxu0
        %v1228 = vadd.f32 0.0, %v1227
        %v1229 = vpop.f32.mrf.mxu0
        %v1230 = vadd.f32 0.0, %v1229
        %v1231 = vpop.f32.mrf.mxu0
        %v1232 = vadd.f32 0.0, %v1231
        %1233 = vmatprep.mubr.bf16.mxu0 %v928
        %1234 = vmatmul.mubr.bf16.gmra.mxu0 %v927
        %v1235 = vpop.f32.mrf.mxu0
        %v1236 = vadd.f32 0.0, %v1235
        %v1237 = vpop.f32.mrf.mxu0
        %v1238 = vadd.f32 0.0, %v1237
        %v1239 = vpop.f32.mrf.mxu0
        %v1240 = vadd.f32 0.0, %v1239
        %v1241 = vpop.f32.mrf.mxu0
        %v1242 = vadd.f32 0.0, %v1241
        %1243 = vmatprep.mubr.bf16.mxu0 %v932
        %1244 = vmatmul.mubr.bf16.gmra.mxu0 %v931
        %v1245 = vpop.f32.mrf.mxu0
        %v1246 = vadd.f32 0.0, %v1245
        %v1247 = vpop.f32.mrf.mxu0
        %v1248 = vadd.f32 0.0, %v1247
        %v1249 = vpop.f32.mrf.mxu0
        %v1250 = vadd.f32 0.0, %v1249
        %v1251 = vpop.f32.mrf.mxu0
        %v1252 = vadd.f32 0.0, %v1251
        %1253 = vmatprep.mubr.bf16.mxu0 %v936
        %1254 = vmatmul.mubr.bf16.gmra.mxu0 %v935
        %v1255 = vpop.f32.mrf.mxu0
        %v1256 = vadd.f32 0.0, %v1255
        %v1257 = vpop.f32.mrf.mxu0
        %v1258 = vadd.f32 0.0, %v1257
        %v1259 = vpop.f32.mrf.mxu0
        %v1260 = vadd.f32 0.0, %v1259
        %v1261 = vpop.f32.mrf.mxu0
        %v1262 = vadd.f32 0.0, %v1261
        %1263 = vmatprep.mubr.bf16.mxu0 %v940
        %1264 = vmatmul.mubr.bf16.gmra.mxu0 %v939
        %v1265 = vpop.f32.mrf.mxu0
        %v1266 = vadd.f32 0.0, %v1265
        %v1267 = vpop.f32.mrf.mxu0
        %v1268 = vadd.f32 0.0, %v1267
        %v1269 = vpop.f32.mrf.mxu0
        %v1270 = vadd.f32 0.0, %v1269
        %v1271 = vpop.f32.mrf.mxu0
        %v1272 = vadd.f32 0.0, %v1271
        %1273 = vmatprep.mubr.bf16.mxu0 %v944
        %1274 = vmatmul.mubr.bf16.gmra.mxu0 %v943
        %v1275 = vpop.f32.mrf.mxu0
        %v1276 = vadd.f32 0.0, %v1275
        %v1277 = vpop.f32.mrf.mxu0
        %v1278 = vadd.f32 0.0, %v1277
        %v1279 = vpop.f32.mrf.mxu0
        %v1280 = vadd.f32 0.0, %v1279
        %v1281 = vpop.f32.mrf.mxu0
        %v1282 = vadd.f32 0.0, %v1281
        %1283 = vmatprep.mubr.bf16.mxu0 %v948
        %1284 = vmatmul.mubr.bf16.gmra.mxu0 %v947
        %v1285 = vpop.f32.mrf.mxu0
        %v1286 = vadd.f32 0.0, %v1285
        %v1287 = vpop.f32.mrf.mxu0
        %v1288 = vadd.f32 0.0, %v1287
        %v1289 = vpop.f32.mrf.mxu0
        %v1290 = vadd.f32 0.0, %v1289
        %v1291 = vpop.f32.mrf.mxu0
        %v1292 = vadd.f32 0.0, %v1291
        %1293 = vmatprep.mubr.bf16.mxu0 %v952
        %1294 = vmatmul.mubr.bf16.gmra.mxu0 %v951
        %v1295 = vpop.f32.mrf.mxu0
        %v1296 = vadd.f32 0.0, %v1295
        %v1297 = vpop.f32.mrf.mxu0
        %v1298 = vadd.f32 0.0, %v1297
        %v1299 = vpop.f32.mrf.mxu0
        %v1300 = vadd.f32 0.0, %v1299
        %v1301 = vpop.f32.mrf.mxu0
        %v1302 = vadd.f32 0.0, %v1301
        %1303 = vmatprep.mubr.bf16.mxu0 %v956
        %1304 = vmatmul.mubr.bf16.gmra.mxu0 %v955
        %v1305 = vpop.f32.mrf.mxu0
        %v1306 = vadd.f32 0.0, %v1305
        %v1307 = vpop.f32.mrf.mxu0
        %v1308 = vadd.f32 0.0, %v1307
        %v1309 = vpop.f32.mrf.mxu0
        %v1310 = vadd.f32 0.0, %v1309
        %v1311 = vpop.f32.mrf.mxu0
        %v1312 = vadd.f32 0.0, %v1311
        %1313 = vmatprep.mubr.bf16.mxu0 %v960
        %1314 = vmatmul.mubr.bf16.gmra.mxu0 %v959
        %v1315 = vpop.f32.mrf.mxu0
        %v1316 = vadd.f32 0.0, %v1315
        %v1317 = vpop.f32.mrf.mxu0
        %v1318 = vadd.f32 0.0, %v1317
        %v1319 = vpop.f32.mrf.mxu0
        %v1320 = vadd.f32 0.0, %v1319
        %v1321 = vpop.f32.mrf.mxu0
        %v1322 = vadd.f32 0.0, %v1321
        %1323 = vmatprep.mubr.bf16.mxu0 %v964
        %1324 = vmatmul.mubr.bf16.gmra.mxu0 %v963
        %v1325 = vpop.f32.mrf.mxu0
        %v1326 = vadd.f32 0.0, %v1325
        %v1327 = vpop.f32.mrf.mxu0
        %v1328 = vadd.f32 0.0, %v1327
        %v1329 = vpop.f32.mrf.mxu0
        %v1330 = vadd.f32 0.0, %v1329
        %v1331 = vpop.f32.mrf.mxu0
        %v1332 = vadd.f32 0.0, %v1331
        %1333 = vmatprep.mubr.bf16.mxu0 %v968
        %1334 = vmatmul.mubr.bf16.gmra.mxu0 %v967
        %v1335 = vpop.f32.mrf.mxu0
        %v1336 = vadd.f32 0.0, %v1335
        %v1337 = vpop.f32.mrf.mxu0
        %v1338 = vadd.f32 0.0, %v1337
        %v1339 = vpop.f32.mrf.mxu0
        %v1340 = vadd.f32 0.0, %v1339
        %v1341 = vpop.f32.mrf.mxu0
        %v1342 = vadd.f32 0.0, %v1341
        %1343 = vmatprep.mubr.bf16.mxu0 %v972
        %1344 = vmatmul.mubr.bf16.gmra.mxu0 %v971
        %v1345 = vpop.f32.mrf.mxu0
        %v1346 = vadd.f32 0.0, %v1345
        %v1347 = vpop.f32.mrf.mxu0
        %v1348 = vadd.f32 0.0, %v1347
        %v1349 = vpop.f32.mrf.mxu0
        %v1350 = vadd.f32 0.0, %v1349
        %v1351 = vpop.f32.mrf.mxu0
        %v1352 = vadd.f32 0.0, %v1351
        %1353 = vmatprep.mubr.bf16.mxu0 %v976
        %1354 = vmatmul.mubr.bf16.gmra.mxu0 %v975
        %v1355 = vpop.f32.mrf.mxu0
        %v1356 = vadd.f32 0.0, %v1355
        %v1357 = vpop.f32.mrf.mxu0
        %v1358 = vadd.f32 0.0, %v1357
        %v1359 = vpop.f32.mrf.mxu0
        %v1360 = vadd.f32 0.0, %v1359
        %v1361 = vpop.f32.mrf.mxu0
        %v1362 = vadd.f32 0.0, %v1361
        %1363 = vmatprep.mubr.bf16.mxu0 %v980
        %1364 = vmatmul.mubr.bf16.gmra.mxu0 %v979
        %v1365 = vpop.f32.mrf.mxu0
        %v1366 = vadd.f32 0.0, %v1365
        %v1367 = vpop.f32.mrf.mxu0
        %v1368 = vadd.f32 0.0, %v1367
        %v1369 = vpop.f32.mrf.mxu0
        %v1370 = vadd.f32 0.0, %v1369
        %v1371 = vpop.f32.mrf.mxu0
        %v1372 = vadd.f32 0.0, %v1371
        %1373 = vmatprep.mubr.bf16.mxu0 %v984
        %1374 = vmatmul.mubr.bf16.gmra.mxu0 %v983
        %v1375 = vpop.f32.mrf.mxu0
        %v1376 = vadd.f32 0.0, %v1375
        %v1377 = vpop.f32.mrf.mxu0
        %v1378 = vadd.f32 0.0, %v1377
        %v1379 = vpop.f32.mrf.mxu0
        %v1380 = vadd.f32 0.0, %v1379
        %v1381 = vpop.f32.mrf.mxu0
        %v1382 = vadd.f32 0.0, %v1381
        %1383 = vmatprep.mubr.bf16.mxu0 %v988
        %1384 = vmatmul.mubr.bf16.gmra.mxu0 %v987
        %v1385 = vpop.f32.mrf.mxu0
        %v1386 = vadd.f32 0.0, %v1385
        %v1387 = vpop.f32.mrf.mxu0
        %v1388 = vadd.f32 0.0, %v1387
        %v1389 = vpop.f32.mrf.mxu0
        %v1390 = vadd.f32 0.0, %v1389
        %v1391 = vpop.f32.mrf.mxu0
        %v1392 = vadd.f32 0.0, %v1391
        %1393 = vmatprep.mubr.bf16.mxu0 %v992
        %1394 = vmatmul.mubr.bf16.gmra.mxu0 %v991
        %v1395 = vpop.f32.mrf.mxu0
        %v1396 = vadd.f32 0.0, %v1395
        %v1397 = vpop.f32.mrf.mxu0
        %v1398 = vadd.f32 0.0, %v1397
        %v1399 = vpop.f32.mrf.mxu0
        %v1400 = vadd.f32 0.0, %v1399
        %v1401 = vpop.f32.mrf.mxu0
        %v1402 = vadd.f32 0.0, %v1401
        %1403 = vmatprep.mubr.bf16.mxu0 %v996
        %1404 = vmatmul.mubr.bf16.gmra.mxu0 %v995
        %v1405 = vpop.f32.mrf.mxu0
        %v1406 = vadd.f32 0.0, %v1405
        %v1407 = vpop.f32.mrf.mxu0
        %v1408 = vadd.f32 0.0, %v1407
        %v1409 = vpop.f32.mrf.mxu0
        %v1410 = vadd.f32 0.0, %v1409
        %v1411 = vpop.f32.mrf.mxu0
        %v1412 = vadd.f32 0.0, %v1411
        %1413 = vmatprep.mubr.bf16.mxu0 %v1000
        %1414 = vmatmul.mubr.bf16.gmra.mxu0 %v999
        %v1415 = vpop.f32.mrf.mxu0
        %v1416 = vadd.f32 0.0, %v1415
        %v1417 = vpop.f32.mrf.mxu0
        %v1418 = vadd.f32 0.0, %v1417
        %v1419 = vpop.f32.mrf.mxu0
        %v1420 = vadd.f32 0.0, %v1419
        %v1421 = vpop.f32.mrf.mxu0
        %v1422 = vadd.f32 0.0, %v1421
        %1423 = vmatprep.mubr.bf16.mxu0 %v1004
        %1424 = vmatmul.mubr.bf16.gmra.mxu0 %v1003
        %v1425 = vpop.f32.mrf.mxu0
        %v1426 = vadd.f32 0.0, %v1425
        %v1427 = vpop.f32.mrf.mxu0
        %v1428 = vadd.f32 0.0, %v1427
        %v1429 = vpop.f32.mrf.mxu0
        %v1430 = vadd.f32 0.0, %v1429
        %v1431 = vpop.f32.mrf.mxu0
        %v1432 = vadd.f32 0.0, %v1431
        %1433 = vmatprep.mubr.bf16.mxu0 %v1008
        %1434 = vmatmul.mubr.bf16.gmra.mxu0 %v1007
        %v1435 = vpop.f32.mrf.mxu0
        %v1436 = vadd.f32 0.0, %v1435
        %v1437 = vpop.f32.mrf.mxu0
        %v1438 = vadd.f32 0.0, %v1437
        %v1439 = vpop.f32.mrf.mxu0
        %v1440 = vadd.f32 0.0, %v1439
        %v1441 = vpop.f32.mrf.mxu0
        %v1442 = vadd.f32 0.0, %v1441
        %1443 = vmatprep.mubr.bf16.mxu0 %v1012
        %1444 = vmatmul.mubr.bf16.gmra.mxu0 %v1011
        %v1445 = vpop.f32.mrf.mxu0
        %v1446 = vadd.f32 0.0, %v1445
        %v1447 = vpop.f32.mrf.mxu0
        %v1448 = vadd.f32 0.0, %v1447
        %v1449 = vpop.f32.mrf.mxu0
        %v1450 = vadd.f32 0.0, %v1449
        %v1451 = vpop.f32.mrf.mxu0
        %v1452 = vadd.f32 0.0, %v1451
        %1453 = vmatprep.mubr.bf16.mxu0 %v1016
        %1454 = vmatmul.mubr.bf16.gmra.mxu0 %v1015
        %v1455 = vpop.f32.mrf.mxu0
        %v1456 = vadd.f32 0.0, %v1455
        %v1457 = vpop.f32.mrf.mxu0
        %v1458 = vadd.f32 0.0, %v1457
        %v1459 = vpop.f32.mrf.mxu0
        %v1460 = vadd.f32 0.0, %v1459
        %v1461 = vpop.f32.mrf.mxu0
        %v1462 = vadd.f32 0.0, %v1461
        %1463 = vmatprep.mubr.bf16.mxu0 %v1020
        %1464 = vmatmul.mubr.bf16.gmra.mxu0 %v1019
        %v1465 = vpop.f32.mrf.mxu0
        %v1466 = vadd.f32 0.0, %v1465
        %v1467 = vpop.f32.mrf.mxu0
        %v1468 = vadd.f32 0.0, %v1467
        %v1469 = vpop.f32.mrf.mxu0
        %v1470 = vadd.f32 0.0, %v1469
        %v1471 = vpop.f32.mrf.mxu0
        %v1472 = vadd.f32 0.0, %v1471
        %1473 = vmatprep.mubr.bf16.mxu0 %v1024
        %1474 = vmatmul.mubr.bf16.gmra.mxu0 %v1023
        %v1475 = vpop.f32.mrf.mxu0
        %v1476 = vadd.f32 0.0, %v1475
        %v1477 = vpop.f32.mrf.mxu0
        %v1478 = vadd.f32 0.0, %v1477
        %v1479 = vpop.f32.mrf.mxu0
        %v1480 = vadd.f32 0.0, %v1479
        %v1481 = vpop.f32.mrf.mxu0
        %v1482 = vadd.f32 0.0, %v1481
        %1483 = vmatprep.mubr.bf16.mxu0 %v1028
        %1484 = vmatmul.mubr.bf16.gmra.mxu0 %v1027
        %v1485 = vpop.f32.mrf.mxu0
        %v1486 = vadd.f32 0.0, %v1485
        %v1487 = vpop.f32.mrf.mxu0
        %v1488 = vadd.f32 0.0, %v1487
        %v1489 = vpop.f32.mrf.mxu0
        %v1490 = vadd.f32 0.0, %v1489
        %v1491 = vpop.f32.mrf.mxu0
        %v1492 = vadd.f32 0.0, %v1491
        %1493 = vmatprep.mubr.bf16.mxu0 %v1032
        %1494 = vmatmul.mubr.bf16.gmra.mxu0 %v1031
        %v1495 = vpop.f32.mrf.mxu0
        %v1496 = vadd.f32 0.0, %v1495
        %v1497 = vpop.f32.mrf.mxu0
        %v1498 = vadd.f32 0.0, %v1497
        %v1499 = vpop.f32.mrf.mxu0
        %v1500 = vadd.f32 0.0, %v1499
        %v1501 = vpop.f32.mrf.mxu0
        %v1502 = vadd.f32 0.0, %v1501
        %1503 = vmatprep.mubr.bf16.mxu0 %v1036
        %1504 = vmatmul.mubr.bf16.gmra.mxu0 %v1035
        %v1505 = vpop.f32.mrf.mxu0
        %v1506 = vadd.f32 0.0, %v1505
        %v1507 = vpop.f32.mrf.mxu0
        %v1508 = vadd.f32 0.0, %v1507
        %v1509 = vpop.f32.mrf.mxu0
        %v1510 = vadd.f32 0.0, %v1509
        %v1511 = vpop.f32.mrf.mxu0
        %v1512 = vadd.f32 0.0, %v1511
        %1513 = vmatprep.mubr.bf16.mxu0 %v1040
        %1514 = vmatmul.mubr.bf16.gmra.mxu0 %v1039
        %v1515 = vpop.f32.mrf.mxu0
        %v1516 = vadd.f32 0.0, %v1515
        %v1517 = vpop.f32.mrf.mxu0
        %v1518 = vadd.f32 0.0, %v1517
        %v1519 = vpop.f32.mrf.mxu0
        %v1520 = vadd.f32 0.0, %v1519
        %v1521 = vpop.f32.mrf.mxu0
        %v1522 = vadd.f32 0.0, %v1521
        %1523 = vdwg.mxu0
        %1524 = vmatprep.subr.bf16.mxu0 %v386
        %1525 = vmatpush1.bf16.msra.mxu0 %v385
        %1526 = vmatprep.subr.bf16.mxu0 %v384
        %1527 = vmatpush1.bf16.msra.mxu0 %v383
        %1528 = vmatprep.subr.bf16.mxu0 %v382
        %1529 = vmatpush1.bf16.msra.mxu0 %v381
        %1530 = vmatprep.subr.bf16.mxu0 %v380
        %1531 = vmatpush1.bf16.msra.mxu0 %v379
        %1532 = vmatprep.subr.bf16.mxu0 %v378
        %1533 = vmatpush1.bf16.msra.mxu0 %v377
        %1534 = vmatprep.subr.bf16.mxu0 %v376
        %1535 = vmatpush1.bf16.msra.mxu0 %v375
        %1536 = vmatprep.subr.bf16.mxu0 %v374
        %1537 = vmatpush1.bf16.msra.mxu0 %v373
        %1538 = vmatprep.subr.bf16.mxu0 %v372
        %1539 = vmatpush1.bf16.msra.mxu0 %v371
        %1540 = vmatprep.subr.bf16.mxu0 %v402
        %1541 = vmatpush2.bf16.msra.mxu0 %v401
        %1542 = vmatprep.subr.bf16.mxu0 %v400
        %1543 = vmatpush2.bf16.msra.mxu0 %v399
        %1544 = vmatprep.subr.bf16.mxu0 %v398
        %1545 = vmatpush2.bf16.msra.mxu0 %v397
        %1546 = vmatprep.subr.bf16.mxu0 %v396
        %1547 = vmatpush2.bf16.msra.mxu0 %v395
        %1548 = vmatprep.subr.bf16.mxu0 %v394
        %1549 = vmatpush2.bf16.msra.mxu0 %v393
        %1550 = vmatprep.subr.bf16.mxu0 %v392
        %1551 = vmatpush2.bf16.msra.mxu0 %v391
        %1552 = vmatprep.subr.bf16.mxu0 %v390
        %1553 = vmatpush2.bf16.msra.mxu0 %v389
        %1554 = vmatprep.subr.bf16.mxu0 %v388
        %1555 = vmatpush2.bf16.msra.mxu0 %v387
        %1556 = vmatprep.mubr.bf16.mxu0 %v918
        %1557 = vmatmul.mubr.bf16.gmra.mxu0 %v917
        %v1558 = vpop.f32.mrf.mxu0
        %v1559 = vadd.f32 %v1206, %v1558
        %v1560 = vpop.f32.mrf.mxu0
        %v1561 = vadd.f32 %v1208, %v1560
        %v1562 = vpop.f32.mrf.mxu0
        %v1563 = vadd.f32 %v1210, %v1562
        %v1564 = vpop.f32.mrf.mxu0
        %v1565 = vadd.f32 %v1212, %v1564
        %1566 = vmatprep.mubr.bf16.mxu0 %v922
        %1567 = vmatmul.mubr.bf16.gmra.mxu0 %v921
        %v1568 = vpop.f32.mrf.mxu0
        %v1569 = vadd.f32 %v1216, %v1568
        %v1570 = vpop.f32.mrf.mxu0
        %v1571 = vadd.f32 %v1218, %v1570
        %v1572 = vpop.f32.mrf.mxu0
        %v1573 = vadd.f32 %v1220, %v1572
        %v1574 = vpop.f32.mrf.mxu0
        %v1575 = vadd.f32 %v1222, %v1574
        %1576 = vmatprep.mubr.bf16.mxu0 %v926
        %1577 = vmatmul.mubr.bf16.gmra.mxu0 %v925
        %v1578 = vpop.f32.mrf.mxu0
        %v1579 = vadd.f32 %v1226, %v1578
        %v1580 = vpop.f32.mrf.mxu0
        %v1581 = vadd.f32 %v1228, %v1580
        %v1582 = vpop.f32.mrf.mxu0
        %v1583 = vadd.f32 %v1230, %v1582
        %v1584 = vpop.f32.mrf.mxu0
        %v1585 = vadd.f32 %v1232, %v1584
        %1586 = vmatprep.mubr.bf16.mxu0 %v930
        %1587 = vmatmul.mubr.bf16.gmra.mxu0 %v929
        %v1588 = vpop.f32.mrf.mxu0
        %v1589 = vadd.f32 %v1236, %v1588
        %v1590 = vpop.f32.mrf.mxu0
        %v1591 = vadd.f32 %v1238, %v1590
        %v1592 = vpop.f32.mrf.mxu0
        %v1593 = vadd.f32 %v1240, %v1592
        %v1594 = vpop.f32.mrf.mxu0
        %v1595 = vadd.f32 %v1242, %v1594
        %1596 = vmatprep.mubr.bf16.mxu0 %v934
        %1597 = vmatmul.mubr.bf16.gmra.mxu0 %v933
        %v1598 = vpop.f32.mrf.mxu0
        %v1599 = vadd.f32 %v1246, %v1598
        %v1600 = vpop.f32.mrf.mxu0
        %v1601 = vadd.f32 %v1248, %v1600
        %v1602 = vpop.f32.mrf.mxu0
        %v1603 = vadd.f32 %v1250, %v1602
        %v1604 = vpop.f32.mrf.mxu0
        %v1605 = vadd.f32 %v1252, %v1604
        %1606 = vmatprep.mubr.bf16.mxu0 %v938
        %1607 = vmatmul.mubr.bf16.gmra.mxu0 %v937
        %v1608 = vpop.f32.mrf.mxu0
        %v1609 = vadd.f32 %v1256, %v1608
        %v1610 = vpop.f32.mrf.mxu0
        %v1611 = vadd.f32 %v1258, %v1610
        %v1612 = vpop.f32.mrf.mxu0
        %v1613 = vadd.f32 %v1260, %v1612
        %v1614 = vpop.f32.mrf.mxu0
        %v1615 = vadd.f32 %v1262, %v1614
        %1616 = vmatprep.mubr.bf16.mxu0 %v942
        %1617 = vmatmul.mubr.bf16.gmra.mxu0 %v941
        %v1618 = vpop.f32.mrf.mxu0
        %v1619 = vadd.f32 %v1266, %v1618
        %v1620 = vpop.f32.mrf.mxu0
        %v1621 = vadd.f32 %v1268, %v1620
        %v1622 = vpop.f32.mrf.mxu0
        %v1623 = vadd.f32 %v1270, %v1622
        %v1624 = vpop.f32.mrf.mxu0
        %v1625 = vadd.f32 %v1272, %v1624
        %1626 = vmatprep.mubr.bf16.mxu0 %v946
        %1627 = vmatmul.mubr.bf16.gmra.mxu0 %v945
        %v1628 = vpop.f32.mrf.mxu0
        %v1629 = vadd.f32 %v1276, %v1628
        %v1630 = vpop.f32.mrf.mxu0
        %v1631 = vadd.f32 %v1278, %v1630
        %v1632 = vpop.f32.mrf.mxu0
        %v1633 = vadd.f32 %v1280, %v1632
        %v1634 = vpop.f32.mrf.mxu0
        %v1635 = vadd.f32 %v1282, %v1634
        %1636 = vmatprep.mubr.bf16.mxu0 %v950
        %1637 = vmatmul.mubr.bf16.gmra.mxu0 %v949
        %v1638 = vpop.f32.mrf.mxu0
        %v1639 = vadd.f32 %v1286, %v1638
        %v1640 = vpop.f32.mrf.mxu0
        %v1641 = vadd.f32 %v1288, %v1640
        %v1642 = vpop.f32.mrf.mxu0
        %v1643 = vadd.f32 %v1290, %v1642
        %v1644 = vpop.f32.mrf.mxu0
        %v1645 = vadd.f32 %v1292, %v1644
        %1646 = vmatprep.mubr.bf16.mxu0 %v954
        %1647 = vmatmul.mubr.bf16.gmra.mxu0 %v953
        %v1648 = vpop.f32.mrf.mxu0
        %v1649 = vadd.f32 %v1296, %v1648
        %v1650 = vpop.f32.mrf.mxu0
        %v1651 = vadd.f32 %v1298, %v1650
        %v1652 = vpop.f32.mrf.mxu0
        %v1653 = vadd.f32 %v1300, %v1652
        %v1654 = vpop.f32.mrf.mxu0
        %v1655 = vadd.f32 %v1302, %v1654
        %1656 = vmatprep.mubr.bf16.mxu0 %v958
        %1657 = vmatmul.mubr.bf16.gmra.mxu0 %v957
        %v1658 = vpop.f32.mrf.mxu0
        %v1659 = vadd.f32 %v1306, %v1658
        %v1660 = vpop.f32.mrf.mxu0
        %v1661 = vadd.f32 %v1308, %v1660
        %v1662 = vpop.f32.mrf.mxu0
        %v1663 = vadd.f32 %v1310, %v1662
        %v1664 = vpop.f32.mrf.mxu0
        %v1665 = vadd.f32 %v1312, %v1664
        %1666 = vmatprep.mubr.bf16.mxu0 %v962
        %1667 = vmatmul.mubr.bf16.gmra.mxu0 %v961
        %v1668 = vpop.f32.mrf.mxu0
        %v1669 = vadd.f32 %v1316, %v1668
        %v1670 = vpop.f32.mrf.mxu0
        %v1671 = vadd.f32 %v1318, %v1670
        %v1672 = vpop.f32.mrf.mxu0
        %v1673 = vadd.f32 %v1320, %v1672
        %v1674 = vpop.f32.mrf.mxu0
        %v1675 = vadd.f32 %v1322, %v1674
        %1676 = vmatprep.mubr.bf16.mxu0 %v966
        %1677 = vmatmul.mubr.bf16.gmra.mxu0 %v965
        %v1678 = vpop.f32.mrf.mxu0
        %v1679 = vadd.f32 %v1326, %v1678
        %v1680 = vpop.f32.mrf.mxu0
        %v1681 = vadd.f32 %v1328, %v1680
        %v1682 = vpop.f32.mrf.mxu0
        %v1683 = vadd.f32 %v1330, %v1682
        %v1684 = vpop.f32.mrf.mxu0
        %v1685 = vadd.f32 %v1332, %v1684
        %1686 = vmatprep.mubr.bf16.mxu0 %v970
        %1687 = vmatmul.mubr.bf16.gmra.mxu0 %v969
        %v1688 = vpop.f32.mrf.mxu0
        %v1689 = vadd.f32 %v1336, %v1688
        %v1690 = vpop.f32.mrf.mxu0
        %v1691 = vadd.f32 %v1338, %v1690
        %v1692 = vpop.f32.mrf.mxu0
        %v1693 = vadd.f32 %v1340, %v1692
        %v1694 = vpop.f32.mrf.mxu0
        %v1695 = vadd.f32 %v1342, %v1694
        %1696 = vmatprep.mubr.bf16.mxu0 %v974
        %1697 = vmatmul.mubr.bf16.gmra.mxu0 %v973
        %v1698 = vpop.f32.mrf.mxu0
        %v1699 = vadd.f32 %v1346, %v1698
        %v1700 = vpop.f32.mrf.mxu0
        %v1701 = vadd.f32 %v1348, %v1700
        %v1702 = vpop.f32.mrf.mxu0
        %v1703 = vadd.f32 %v1350, %v1702
        %v1704 = vpop.f32.mrf.mxu0
        %v1705 = vadd.f32 %v1352, %v1704
        %1706 = vmatprep.mubr.bf16.mxu0 %v978
        %1707 = vmatmul.mubr.bf16.gmra.mxu0 %v977
        %v1708 = vpop.f32.mrf.mxu0
        %v1709 = vadd.f32 %v1356, %v1708
        %v1710 = vpop.f32.mrf.mxu0
        %v1711 = vadd.f32 %v1358, %v1710
        %v1712 = vpop.f32.mrf.mxu0
        %v1713 = vadd.f32 %v1360, %v1712
        %v1714 = vpop.f32.mrf.mxu0
        %v1715 = vadd.f32 %v1362, %v1714
        %1716 = vmatprep.mubr.bf16.mxu0 %v982
        %1717 = vmatmul.mubr.bf16.gmra.mxu0 %v981
        %v1718 = vpop.f32.mrf.mxu0
        %v1719 = vadd.f32 %v1366, %v1718
        %v1720 = vpop.f32.mrf.mxu0
        %v1721 = vadd.f32 %v1368, %v1720
        %v1722 = vpop.f32.mrf.mxu0
        %v1723 = vadd.f32 %v1370, %v1722
        %v1724 = vpop.f32.mrf.mxu0
        %v1725 = vadd.f32 %v1372, %v1724
        %1726 = vmatprep.mubr.bf16.mxu0 %v986
        %1727 = vmatmul.mubr.bf16.gmra.mxu0 %v985
        %v1728 = vpop.f32.mrf.mxu0
        %v1729 = vadd.f32 %v1376, %v1728
        %v1730 = vpop.f32.mrf.mxu0
        %v1731 = vadd.f32 %v1378, %v1730
        %v1732 = vpop.f32.mrf.mxu0
        %v1733 = vadd.f32 %v1380, %v1732
        %v1734 = vpop.f32.mrf.mxu0
        %v1735 = vadd.f32 %v1382, %v1734
        %1736 = vmatprep.mubr.bf16.mxu0 %v990
        %1737 = vmatmul.mubr.bf16.gmra.mxu0 %v989
        %v1738 = vpop.f32.mrf.mxu0
        %v1739 = vadd.f32 %v1386, %v1738
        %v1740 = vpop.f32.mrf.mxu0
        %v1741 = vadd.f32 %v1388, %v1740
        %v1742 = vpop.f32.mrf.mxu0
        %v1743 = vadd.f32 %v1390, %v1742
        %v1744 = vpop.f32.mrf.mxu0
        %v1745 = vadd.f32 %v1392, %v1744
        %1746 = vmatprep.mubr.bf16.mxu0 %v994
        %1747 = vmatmul.mubr.bf16.gmra.mxu0 %v993
        %v1748 = vpop.f32.mrf.mxu0
        %v1749 = vadd.f32 %v1396, %v1748
        %v1750 = vpop.f32.mrf.mxu0
        %v1751 = vadd.f32 %v1398, %v1750
        %v1752 = vpop.f32.mrf.mxu0
        %v1753 = vadd.f32 %v1400, %v1752
        %v1754 = vpop.f32.mrf.mxu0
        %v1755 = vadd.f32 %v1402, %v1754
        %1756 = vmatprep.mubr.bf16.mxu0 %v998
        %1757 = vmatmul.mubr.bf16.gmra.mxu0 %v997
        %v1758 = vpop.f32.mrf.mxu0
        %v1759 = vadd.f32 %v1406, %v1758
        %v1760 = vpop.f32.mrf.mxu0
        %v1761 = vadd.f32 %v1408, %v1760
        %v1762 = vpop.f32.mrf.mxu0
        %v1763 = vadd.f32 %v1410, %v1762
        %v1764 = vpop.f32.mrf.mxu0
        %v1765 = vadd.f32 %v1412, %v1764
        %1766 = vmatprep.mubr.bf16.mxu0 %v1002
        %1767 = vmatmul.mubr.bf16.gmra.mxu0 %v1001
        %v1768 = vpop.f32.mrf.mxu0
        %v1769 = vadd.f32 %v1416, %v1768
        %v1770 = vpop.f32.mrf.mxu0
        %v1771 = vadd.f32 %v1418, %v1770
        %v1772 = vpop.f32.mrf.mxu0
        %v1773 = vadd.f32 %v1420, %v1772
        %v1774 = vpop.f32.mrf.mxu0
        %v1775 = vadd.f32 %v1422, %v1774
        %1776 = vmatprep.mubr.bf16.mxu0 %v1006
        %1777 = vmatmul.mubr.bf16.gmra.mxu0 %v1005
        %v1778 = vpop.f32.mrf.mxu0
        %v1779 = vadd.f32 %v1426, %v1778
        %v1780 = vpop.f32.mrf.mxu0
        %v1781 = vadd.f32 %v1428, %v1780
        %v1782 = vpop.f32.mrf.mxu0
        %v1783 = vadd.f32 %v1430, %v1782
        %v1784 = vpop.f32.mrf.mxu0
        %v1785 = vadd.f32 %v1432, %v1784
        %1786 = vmatprep.mubr.bf16.mxu0 %v1010
        %1787 = vmatmul.mubr.bf16.gmra.mxu0 %v1009
        %v1788 = vpop.f32.mrf.mxu0
        %v1789 = vadd.f32 %v1436, %v1788
        %v1790 = vpop.f32.mrf.mxu0
        %v1791 = vadd.f32 %v1438, %v1790
        %v1792 = vpop.f32.mrf.mxu0
        %v1793 = vadd.f32 %v1440, %v1792
        %v1794 = vpop.f32.mrf.mxu0
        %v1795 = vadd.f32 %v1442, %v1794
        %1796 = vmatprep.mubr.bf16.mxu0 %v1014
        %1797 = vmatmul.mubr.bf16.gmra.mxu0 %v1013
        %v1798 = vpop.f32.mrf.mxu0
        %v1799 = vadd.f32 %v1446, %v1798
        %v1800 = vpop.f32.mrf.mxu0
        %v1801 = vadd.f32 %v1448, %v1800
        %v1802 = vpop.f32.mrf.mxu0
        %v1803 = vadd.f32 %v1450, %v1802
        %v1804 = vpop.f32.mrf.mxu0
        %v1805 = vadd.f32 %v1452, %v1804
        %1806 = vmatprep.mubr.bf16.mxu0 %v1018
        %1807 = vmatmul.mubr.bf16.gmra.mxu0 %v1017
        %v1808 = vpop.f32.mrf.mxu0
        %v1809 = vadd.f32 %v1456, %v1808
        %v1810 = vpop.f32.mrf.mxu0
        %v1811 = vadd.f32 %v1458, %v1810
        %v1812 = vpop.f32.mrf.mxu0
        %v1813 = vadd.f32 %v1460, %v1812
        %v1814 = vpop.f32.mrf.mxu0
        %v1815 = vadd.f32 %v1462, %v1814
        %1816 = vmatprep.mubr.bf16.mxu0 %v1022
        %1817 = vmatmul.mubr.bf16.gmra.mxu0 %v1021
        %v1818 = vpop.f32.mrf.mxu0
        %v1819 = vadd.f32 %v1466, %v1818
        %v1820 = vpop.f32.mrf.mxu0
        %v1821 = vadd.f32 %v1468, %v1820
        %v1822 = vpop.f32.mrf.mxu0
        %v1823 = vadd.f32 %v1470, %v1822
        %v1824 = vpop.f32.mrf.mxu0
        %v1825 = vadd.f32 %v1472, %v1824
        %1826 = vmatprep.mubr.bf16.mxu0 %v1026
        %1827 = vmatmul.mubr.bf16.gmra.mxu0 %v1025
        %v1828 = vpop.f32.mrf.mxu0
        %v1829 = vadd.f32 %v1476, %v1828
        %v1830 = vpop.f32.mrf.mxu0
        %v1831 = vadd.f32 %v1478, %v1830
        %v1832 = vpop.f32.mrf.mxu0
        %v1833 = vadd.f32 %v1480, %v1832
        %v1834 = vpop.f32.mrf.mxu0
        %v1835 = vadd.f32 %v1482, %v1834
        %1836 = vmatprep.mubr.bf16.mxu0 %v1030
        %1837 = vmatmul.mubr.bf16.gmra.mxu0 %v1029
        %v1838 = vpop.f32.mrf.mxu0
        %v1839 = vadd.f32 %v1486, %v1838
        %v1840 = vpop.f32.mrf.mxu0
        %v1841 = vadd.f32 %v1488, %v1840
        %v1842 = vpop.f32.mrf.mxu0
        %v1843 = vadd.f32 %v1490, %v1842
        %v1844 = vpop.f32.mrf.mxu0
        %v1845 = vadd.f32 %v1492, %v1844
        %1846 = vmatprep.mubr.bf16.mxu0 %v1034
        %1847 = vmatmul.mubr.bf16.gmra.mxu0 %v1033
        %v1848 = vpop.f32.mrf.mxu0
        %v1849 = vadd.f32 %v1496, %v1848
        %v1850 = vpop.f32.mrf.mxu0
        %v1851 = vadd.f32 %v1498, %v1850
        %v1852 = vpop.f32.mrf.mxu0
        %v1853 = vadd.f32 %v1500, %v1852
        %v1854 = vpop.f32.mrf.mxu0
        %v1855 = vadd.f32 %v1502, %v1854
        %1856 = vmatprep.mubr.bf16.mxu0 %v1038
        %1857 = vmatmul.mubr.bf16.gmra.mxu0 %v1037
        %v1858 = vpop.f32.mrf.mxu0
        %v1859 = vadd.f32 %v1506, %v1858
        %v1860 = vpop.f32.mrf.mxu0
        %v1861 = vadd.f32 %v1508, %v1860
        %v1862 = vpop.f32.mrf.mxu0
        %v1863 = vadd.f32 %v1510, %v1862
        %v1864 = vpop.f32.mrf.mxu0
        %v1865 = vadd.f32 %v1512, %v1864
        %1866 = vmatprep.mubr.bf16.mxu0 %v1042
        %1867 = vmatmul.mubr.bf16.gmra.mxu0 %v1041
        %v1868 = vpop.f32.mrf.mxu0
        %v1869 = vadd.f32 %v1516, %v1868
        %v1870 = vpop.f32.mrf.mxu0
        %v1871 = vadd.f32 %v1518, %v1870
        %v1872 = vpop.f32.mrf.mxu0
        %v1873 = vadd.f32 %v1520, %v1872
        %v1874 = vpop.f32.mrf.mxu0
        %v1875 = vadd.f32 %v1522, %v1874
        %1876 = vdwg.mxu0
        %1877 = vst [vmem:[%s209] sm:$0xff] %v1559
        %vm1878 = vcmask 556032
        %1879 = vst.msk [vmem:[%s209 + $0x8] sm:$0xff] %vm1878, %v1561
        %1880 = vst [vmem:[%s209 + $0x10] sm:$0xff] %v1563
        %1881 = vst.msk [vmem:[%s209 + $0x18] sm:$0xff] %vm1878, %v1565
        %1882 = vst [vmem:[%s209 + $0x20] sm:$0xff] %v1569
        %1883 = vst.msk [vmem:[%s209 + $0x28] sm:$0xff] %vm1878, %v1571
        %1884 = vst [vmem:[%s209 + $0x30] sm:$0xff] %v1573
        %1885 = vst.msk [vmem:[%s209 + $0x38] sm:$0xff] %vm1878, %v1575
        %1886 = vst [vmem:[%s209 + $0x40] sm:$0xff] %v1579
        %1887 = vst.msk [vmem:[%s209 + $0x48] sm:$0xff] %vm1878, %v1581
        %1888 = vst [vmem:[%s209 + $0x50] sm:$0xff] %v1583
        %1889 = vst.msk [vmem:[%s209 + $0x58] sm:$0xff] %vm1878, %v1585
        %1890 = vst [vmem:[%s209 + $0x60] sm:$0xff] %v1589
        %1891 = vst.msk [vmem:[%s209 + $0x68] sm:$0xff] %vm1878, %v1591
        %1892 = vst [vmem:[%s209 + $0x70] sm:$0xff] %v1593
        %1893 = vst.msk [vmem:[%s209 + $0x78] sm:$0xff] %vm1878, %v1595
        %1894 = vst [vmem:[%s209 + $0x80] sm:$0xff] %v1599
        %1895 = vst.msk [vmem:[%s209 + $0x88] sm:$0xff] %vm1878, %v1601
        %1896 = vst [vmem:[%s209 + $0x90] sm:$0xff] %v1603
        %1897 = vst.msk [vmem:[%s209 + $0x98] sm:$0xff] %vm1878, %v1605
        %1898 = vst [vmem:[%s209 + $0xa0] sm:$0xff] %v1609
        %1899 = vst.msk [vmem:[%s209 + $0xa8] sm:$0xff] %vm1878, %v1611
        %1900 = vst [vmem:[%s209 + $0xb0] sm:$0xff] %v1613
        %1901 = vst.msk [vmem:[%s209 + $0xb8] sm:$0xff] %vm1878, %v1615
        %1902 = vst [vmem:[%s209 + $0xc0] sm:$0xff] %v1619
        %1903 = vst.msk [vmem:[%s209 + $0xc8] sm:$0xff] %vm1878, %v1621
        %1904 = vst [vmem:[%s209 + $0xd0] sm:$0xff] %v1623
        %1905 = vst.msk [vmem:[%s209 + $0xd8] sm:$0xff] %vm1878, %v1625
        %1906 = vst [vmem:[%s209 + $0xe0] sm:$0xff] %v1629
        %1907 = vst.msk [vmem:[%s209 + $0xe8] sm:$0xff] %vm1878, %v1631
        %1908 = vst [vmem:[%s209 + $0xf0] sm:$0xff] %v1633
        %1909 = vst.msk [vmem:[%s209 + $0xf8] sm:$0xff] %vm1878, %v1635
        %1910 = vst [vmem:[%s209 + $0x100] sm:$0xff] %v1639
        %1911 = vst.msk [vmem:[%s209 + $0x108] sm:$0xff] %vm1878, %v1641
        %1912 = vst [vmem:[%s209 + $0x110] sm:$0xff] %v1643
        %1913 = vst.msk [vmem:[%s209 + $0x118] sm:$0xff] %vm1878, %v1645
        %1914 = vst [vmem:[%s209 + $0x120] sm:$0xff] %v1649
        %1915 = vst.msk [vmem:[%s209 + $0x128] sm:$0xff] %vm1878, %v1651
        %1916 = vst [vmem:[%s209 + $0x130] sm:$0xff] %v1653
        %1917 = vst.msk [vmem:[%s209 + $0x138] sm:$0xff] %vm1878, %v1655
        %1918 = vst [vmem:[%s209 + $0x140] sm:$0xff] %v1659
        %1919 = vst.msk [vmem:[%s209 + $0x148] sm:$0xff] %vm1878, %v1661
        %1920 = vst [vmem:[%s209 + $0x150] sm:$0xff] %v1663
        %1921 = vst.msk [vmem:[%s209 + $0x158] sm:$0xff] %vm1878, %v1665
        %1922 = vst [vmem:[%s209 + $0x160] sm:$0xff] %v1669
        %1923 = vst.msk [vmem:[%s209 + $0x168] sm:$0xff] %vm1878, %v1671
        %1924 = vst [vmem:[%s209 + $0x170] sm:$0xff] %v1673
        %1925 = vst.msk [vmem:[%s209 + $0x178] sm:$0xff] %vm1878, %v1675
        %1926 = vst [vmem:[%s209 + $0x180] sm:$0xff] %v1679
        %1927 = vst.msk [vmem:[%s209 + $0x188] sm:$0xff] %vm1878, %v1681
        %1928 = vst [vmem:[%s209 + $0x190] sm:$0xff] %v1683
        %1929 = vst.msk [vmem:[%s209 + $0x198] sm:$0xff] %vm1878, %v1685
        %1930 = vst [vmem:[%s209 + $0x1a0] sm:$0xff] %v1689
        %1931 = vst.msk [vmem:[%s209 + $0x1a8] sm:$0xff] %vm1878, %v1691
        %1932 = vst [vmem:[%s209 + $0x1b0] sm:$0xff] %v1693
        %1933 = vst.msk [vmem:[%s209 + $0x1b8] sm:$0xff] %vm1878, %v1695
        %1934 = vst [vmem:[%s209 + $0x1c0] sm:$0xff] %v1699
        %1935 = vst.msk [vmem:[%s209 + $0x1c8] sm:$0xff] %vm1878, %v1701
        %1936 = vst [vmem:[%s209 + $0x1d0] sm:$0xff] %v1703
        %1937 = vst.msk [vmem:[%s209 + $0x1d8] sm:$0xff] %vm1878, %v1705
        %1938 = vst [vmem:[%s209 + $0x1e0] sm:$0xff] %v1709
        %1939 = vst.msk [vmem:[%s209 + $0x1e8] sm:$0xff] %vm1878, %v1711
        %1940 = vst [vmem:[%s209 + $0x1f0] sm:$0xff] %v1713
        %1941 = vst.msk [vmem:[%s209 + $0x1f8] sm:$0xff] %vm1878, %v1715
        %1942 = vst [vmem:[%s209 + $0x200] sm:$0xff] %v1719
        %1943 = vst.msk [vmem:[%s209 + $0x208] sm:$0xff] %vm1878, %v1721
        %1944 = vst [vmem:[%s209 + $0x210] sm:$0xff] %v1723
        %1945 = vst.msk [vmem:[%s209 + $0x218] sm:$0xff] %vm1878, %v1725
        %1946 = vst [vmem:[%s209 + $0x220] sm:$0xff] %v1729
        %1947 = vst.msk [vmem:[%s209 + $0x228] sm:$0xff] %vm1878, %v1731
        %1948 = vst [vmem:[%s209 + $0x230] sm:$0xff] %v1733
        %1949 = vst.msk [vmem:[%s209 + $0x238] sm:$0xff] %vm1878, %v1735
        %1950 = vst [vmem:[%s209 + $0x240] sm:$0xff] %v1739
        %1951 = vst.msk [vmem:[%s209 + $0x248] sm:$0xff] %vm1878, %v1741
        %1952 = vst [vmem:[%s209 + $0x250] sm:$0xff] %v1743
        %1953 = vst.msk [vmem:[%s209 + $0x258] sm:$0xff] %vm1878, %v1745
        %1954 = vst [vmem:[%s209 + $0x260] sm:$0xff] %v1749
        %1955 = vst.msk [vmem:[%s209 + $0x268] sm:$0xff] %vm1878, %v1751
        %1956 = vst [vmem:[%s209 + $0x270] sm:$0xff] %v1753
        %1957 = vst.msk [vmem:[%s209 + $0x278] sm:$0xff] %vm1878, %v1755
        %1958 = vst [vmem:[%s209 + $0x280] sm:$0xff] %v1759
        %1959 = vst.msk [vmem:[%s209 + $0x288] sm:$0xff] %vm1878, %v1761
        %1960 = vst [vmem:[%s209 + $0x290] sm:$0xff] %v1763
        %1961 = vst.msk [vmem:[%s209 + $0x298] sm:$0xff] %vm1878, %v1765
        %1962 = vst [vmem:[%s209 + $0x2a0] sm:$0xff] %v1769
        %1963 = vst.msk [vmem:[%s209 + $0x2a8] sm:$0xff] %vm1878, %v1771
        %1964 = vst [vmem:[%s209 + $0x2b0] sm:$0xff] %v1773
        %1965 = vst.msk [vmem:[%s209 + $0x2b8] sm:$0xff] %vm1878, %v1775
        %1966 = vst [vmem:[%s209 + $0x2c0] sm:$0xff] %v1779
        %1967 = vst.msk [vmem:[%s209 + $0x2c8] sm:$0xff] %vm1878, %v1781
        %1968 = vst [vmem:[%s209 + $0x2d0] sm:$0xff] %v1783
        %1969 = vst.msk [vmem:[%s209 + $0x2d8] sm:$0xff] %vm1878, %v1785
        %1970 = vst [vmem:[%s209 + $0x2e0] sm:$0xff] %v1789
        %1971 = vst.msk [vmem:[%s209 + $0x2e8] sm:$0xff] %vm1878, %v1791
        %1972 = vst [vmem:[%s209 + $0x2f0] sm:$0xff] %v1793
        %1973 = vst.msk [vmem:[%s209 + $0x2f8] sm:$0xff] %vm1878, %v1795
        %1974 = vst [vmem:[%s209 + $0x300] sm:$0xff] %v1799
        %1975 = vst.msk [vmem:[%s209 + $0x308] sm:$0xff] %vm1878, %v1801
        %1976 = vst [vmem:[%s209 + $0x310] sm:$0xff] %v1803
        %1977 = vst.msk [vmem:[%s209 + $0x318] sm:$0xff] %vm1878, %v1805
        %1978 = vst [vmem:[%s209 + $0x320] sm:$0xff] %v1809
        %1979 = vst.msk [vmem:[%s209 + $0x328] sm:$0xff] %vm1878, %v1811
        %1980 = vst [vmem:[%s209 + $0x330] sm:$0xff] %v1813
        %1981 = vst.msk [vmem:[%s209 + $0x338] sm:$0xff] %vm1878, %v1815
        %1982 = vst [vmem:[%s209 + $0x340] sm:$0xff] %v1819
        %1983 = vst.msk [vmem:[%s209 + $0x348] sm:$0xff] %vm1878, %v1821
        %1984 = vst [vmem:[%s209 + $0x350] sm:$0xff] %v1823
        %1985 = vst.msk [vmem:[%s209 + $0x358] sm:$0xff] %vm1878, %v1825
        %1986 = vst [vmem:[%s209 + $0x360] sm:$0xff] %v1829
        %1987 = vst.msk [vmem:[%s209 + $0x368] sm:$0xff] %vm1878, %v1831
        %1988 = vst [vmem:[%s209 + $0x370] sm:$0xff] %v1833
        %1989 = vst.msk [vmem:[%s209 + $0x378] sm:$0xff] %vm1878, %v1835
        %1990 = vst [vmem:[%s209 + $0x380] sm:$0xff] %v1839
        %1991 = vst.msk [vmem:[%s209 + $0x388] sm:$0xff] %vm1878, %v1841
        %1992 = vst [vmem:[%s209 + $0x390] sm:$0xff] %v1843
        %1993 = vst.msk [vmem:[%s209 + $0x398] sm:$0xff] %vm1878, %v1845
        %1994 = vst [vmem:[%s209 + $0x3a0] sm:$0xff] %v1849
        %1995 = vst.msk [vmem:[%s209 + $0x3a8] sm:$0xff] %vm1878, %v1851
        %1996 = vst [vmem:[%s209 + $0x3b0] sm:$0xff] %v1853
        %1997 = vst.msk [vmem:[%s209 + $0x3b8] sm:$0xff] %vm1878, %v1855
        %1998 = vst [vmem:[%s209 + $0x3c0] sm:$0xff] %v1859
        %1999 = vst.msk [vmem:[%s209 + $0x3c8] sm:$0xff] %vm1878, %v1861
        %2000 = vst [vmem:[%s209 + $0x3d0] sm:$0xff] %v1863
        %2001 = vst.msk [vmem:[%s209 + $0x3d8] sm:$0xff] %vm1878, %v1865
        %2002 = vst [vmem:[%s209 + $0x3e0] sm:$0xff] %v1869
        %2003 = vst.msk [vmem:[%s209 + $0x3e8] sm:$0xff] %vm1878, %v1871
        %2004 = vst [vmem:[%s209 + $0x3f0] sm:$0xff] %v1873
        %2005 = vst.msk [vmem:[%s209 + $0x3f8] sm:$0xff] %vm1878, %v1875
        %s2006 = smul.u32 64, %s20
        %p2007 = scmp.lt.s32.totalorder %s21, 0
        %s2008 = scalar_select %p2007, %s21, 0
        %p2009 = scmp.lt.s32.totalorder %s2006, 127
        %s2010 = scalar_select %p2009, %s2006, 127
        %s2011 = smul.addr %s2010, 2
        %s2012 = smul.addr %s2008, 256
        %s2013 = sadd.s32 %s2011, %s2012
        %s2014 = smul.addr %s2013, 8
        %s2015 = scalar_lea.vmem %s2, %s2014
        // Predicated region
        $region33: #{conv2d_1x1.1} parent=27 // pred_check
          %p2016 = pneg %p100
        $region34: #{conv2d_1x1.1} parent=27 // pred_check_branch
          %2018 = sbr.rel (%p2016) target = $region36
        $region35: #{conv2d_1x1.1} parent=27 // pred_region
          %s2019 = smul.u32 64, %s20
        $region36: #{conv2d_1x1.1} parent=27 // pred_fallthru
          _
      $region28: #{conv2d_1x1.1} parent=5 // pred_fallthru
        _
      %p2020 = scmp.le.s32.totalorder 2, %s11
      // Predicated region
      $region37: #{conv2d_1x1.1} parent=5 // pred_check
        %p2021 = pneg %p2020
      $region38: #{conv2d_1x1.1} parent=5 // pred_check_branch
        %2023 = sbr.rel (%p2021) target = $region40
      $region39: #{conv2d_1x1.1} parent=5 // pred_region
        %s2024 = ssub.s32 %s11, 2
        // Predicated region
        $region41: #{conv2d_1x1.1} parent=39 // pred_check
          %p2025 = pneg %p106
        $region42: #{conv2d_1x1.1} parent=39 // pred_check_branch
          %2027 = sbr.rel (%p2025) target = $region44
        $region43: #{conv2d_1x1.1} parent=39 // pred_region
          %s2028 = smul.u32 64, %s22
          %p2029 = scmp.lt.s32.totalorder %s23, 0
          %s2030 = scalar_select %p2029, %s23, 0
          %p2031 = scmp.lt.s32.totalorder %s2028, 127
          %s2032 = scalar_select %p2031, %s2028, 127
          %s2033 = smul.addr %s2032, 2
          %s2034 = smul.addr %s2030, 256
          %s2035 = sadd.s32 %s2033, %s2034
          %s2036 = smul.addr %s2035, 8
          %s2037 = scalar_lea.vmem %s2, %s2036
        $region44: #{conv2d_1x1.1} parent=39 // pred_fallthru
          _
      $region40: #{conv2d_1x1.1} parent=5 // pred_fallthru
        _
    $region6: #{conv2d_1x1.1} parent=1 // loop_footer
      %s15 = sadd.s32 1, %s11
    $region7: #{conv2d_1x1.1} parent=1 // loop_footer_branch
      %10 = sbr.rel target = $region3
    $region8: #{conv2d_1x1.1} parent=1 // loop_exit
      _
    %2038 = vsyncpa [#allocation3], 1
    %s2039 = scalar_lea.sflag [#allocation3], 1
    %2040 = vsyncpa %s2039, 1

</llo_original>
